<compile_context>
chip_gen: v6e
topology: v6e:2x2x1
jax: 0.10.0
libtpu: 0.0.40
codegen_flags: <defaults>
</compile_context>

<pallas_src>
import jax
import jax.numpy as jnp
from jax.experimental import pallas as pl
from jax.experimental.pallas import tpu as pltpu

EPS = 1e-5


def _block_b_kernel(p00_ref, p01_ref, p10_ref, p11_ref,
                    w13_ref, w2_ref,
                    g13_ref, b13_ref, g2_ref, b2_ref,
                    o_ref, pad2_ref):
    # p{a}{b}_ref: phase (a,b) of the zero-padded input, shape (N, Ho+1, Wo+1, Cin)
    # w13_ref: (9*Cin, 2*Cout) bf16   [conv1 | conv3 zero-embedded at tap 4]
    # w2_ref : (9*Cout, Cout)  bf16
    # g13/b13: (1, 2*Cout) f32 BN affine params (bn1 | bn3);  g2/b2: (1, Cout)
    # o_ref  : (N*Ho*Wo, Cout) f32
    # pad2_ref: VMEM scratch (N, Ho+2, Wo+2, Cout) f32 (padded input of conv2)
    N, Hp1, Wp1, Cin = p00_ref.shape
    Ho, Wo = Hp1 - 1, Wp1 - 1
    Cout = w2_ref.shape[1]
    R = N * Ho * Wo
    mxu_dtype = w13_ref.dtype
    inv_r = 1.0 / R

    # Load the four stride-2 phases once; all further slicing is unit-stride.
    phases = {(0, 0): p00_ref[...], (0, 1): p01_ref[...],
              (1, 0): p10_ref[...], (1, 1): p11_ref[...]}

    # ---- conv1 (3x3/s2) + conv3 shortcut (1x1/s2): ONE im2col matmul --------
    # Tap (dy,dx) of output (i,j) reads padded pixel (2i+dy, 2j+dx), i.e.
    # phase (dy%2, dx%2) at (i + dy//2, j + dx//2). The 1x1/s2 shortcut reads
    # exactly tap (1,1), so its weight rides along as extra output columns.
    taps1 = [phases[(dy % 2, dx % 2)][:, dy // 2:dy // 2 + Ho, dx // 2:dx // 2 + Wo, :]
             for dy in range(3) for dx in range(3)]
    cols1 = jnp.concatenate(taps1, axis=-1).reshape(R, 9 * Cin)
    y13 = jnp.dot(cols1.astype(mxu_dtype), w13_ref[...],
                  preferred_element_type=jnp.float32)           # (R, 2*Cout) f32

    # ---- fused training-mode BatchNorm: one sum/sumsq reduction + one FMA ---
    def bn_scale_shift(y, g_ref, b_ref):
        mu = jnp.sum(y, axis=0, keepdims=True) * inv_r
        var = jnp.sum(y * y, axis=0, keepdims=True) * inv_r - mu * mu
        scale = g_ref[...] * jax.lax.rsqrt(var + EPS)
        shift = b_ref[...] - mu * scale
        return scale, shift

    sc13, sh13 = bn_scale_shift(y13, g13_ref, b13_ref)          # bn1 | bn3 together
    a13 = y13 * sc13 + sh13
    a1 = jnp.maximum(a13[:, :Cout], 0.0)                        # relu(bn1(conv1))
    shortcut = a13[:, Cout:]                                    # bn3(conv3), no relu

    # ---- conv2: 3x3 / stride 1 via pad scratch + ONE im2col matmul ----------
    # Zero ONLY the 1-pixel halo; the interior is fully overwritten below.
    pad2_ref[:, 0:1, :, :] = jnp.zeros((N, 1, Wo + 2, Cout), jnp.float32)
    pad2_ref[:, Ho + 1:Ho + 2, :, :] = jnp.zeros((N, 1, Wo + 2, Cout), jnp.float32)
    pad2_ref[:, :, 0:1, :] = jnp.zeros((N, Ho + 2, 1, Cout), jnp.float32)
    pad2_ref[:, :, Wo + 1:Wo + 2, :] = jnp.zeros((N, Ho + 2, 1, Cout), jnp.float32)
    pad2_ref[:, 1:Ho + 1, 1:Wo + 1, :] = a1.reshape(N, Ho, Wo, Cout)
    xp2 = pad2_ref[...]

    # Only 3 sublane-offset (W) slices; the per-tap H shifts are on a major dim.
    wsh = [xp2[:, :, dx:dx + Wo, :] for dx in range(3)]
    taps2 = [wsh[dx][:, dy:dy + Ho, :, :] for dy in range(3) for dx in range(3)]
    cols2 = jnp.concatenate(taps2, axis=-1).reshape(R, 9 * Cout)
    y2 = jnp.dot(cols2.astype(mxu_dtype), w2_ref[...],
                 preferred_element_type=jnp.float32)            # (R, Cout) f32

    sc2, sh2 = bn_scale_shift(y2, g2_ref, b2_ref)
    o_ref[...] = jnp.maximum(y2 * sc2 + sh2 + shortcut, 0.0)


def init_block_b(key, in_channels, out_channels):
    ks = jax.random.split(key, 12)

    def conv_w(k, kh, kw, cin, cout):
        fan = cin * kh * kw
        return jax.random.normal(k, (kh, kw, cin, cout), jnp.float32) / jnp.sqrt(fan)

    # Conv weights stored HWIO (cross-correlation, like PyTorch). Biases are
    # kept for reference fidelity even though training-mode BN cancels them.
    return dict(
        w1=conv_w(ks[0], 3, 3, in_channels, out_channels),
        cb1=0.05 * jax.random.normal(ks[1], (out_channels,), jnp.float32),
        w2=conv_w(ks[2], 3, 3, out_channels, out_channels),
        cb2=0.05 * jax.random.normal(ks[3], (out_channels,), jnp.float32),
        w3=conv_w(ks[4], 1, 1, in_channels, out_channels),
        cb3=0.05 * jax.random.normal(ks[5], (out_channels,), jnp.float32),
        g1=1.0 + 0.1 * jax.random.normal(ks[6], (out_channels,), jnp.float32),
        b1=0.1 * jax.random.normal(ks[7], (out_channels,), jnp.float32),
        g2=1.0 + 0.1 * jax.random.normal(ks[8], (out_channels,), jnp.float32),
        b2=0.1 * jax.random.normal(ks[9], (out_channels,), jnp.float32),
        g3=1.0 + 0.1 * jax.random.normal(ks[10], (out_channels,), jnp.float32),
        b3=0.1 * jax.random.normal(ks[11], (out_channels,), jnp.float32),
    )


def block_b_forward(x_nchw, p, mxu_dtype=jnp.bfloat16):
    """Public entry point: NCHW in, NCHW out (PyTorch convention)."""
    N, Cin, H, W = x_nchw.shape
    assert H % 2 == 0 and W % 2 == 0, "stride-2 phase split assumes even H, W"
    Cout = p["w1"].shape[-1]
    Ho, Wo = H // 2, W // 2
    R = N * Ho * Wo

    # NHWC (C on the lane axis), zero-pad, then space-to-depth phase split so
    # the kernel never needs strided slices (layout plumbing only).
    x = jnp.transpose(x_nchw, (0, 2, 3, 1)).astype(jnp.float32)
    xp = jnp.pad(x, ((0, 0), (1, 1), (1, 1), (0, 0)))          # (N, H+2, W+2, Cin)
    p00 = xp[:, 0::2, 0::2, :]                                 # each (N, Ho+1, Wo+1, Cin)
    p01 = xp[:, 0::2, 1::2, :]
    p10 = xp[:, 1::2, 0::2, :]
    p11 = xp[:, 1::2, 1::2, :]

    # Pre-reshape weights to im2col layout (tap-major: (dy, dx, cin)).
    # conv3's 1x1 weight is zero-embedded at the centre tap (dy=1, dx=1 -> tap 4)
    # and concatenated as extra output columns -> a single fused stage-1 matmul.
    w1r = p["w1"].reshape(9 * Cin, Cout)
    w3e = jnp.zeros((9, Cin, Cout), jnp.float32).at[4].set(
        p["w3"].reshape(Cin, Cout)).reshape(9 * Cin, Cout)
    w13 = jnp.concatenate([w1r, w3e], axis=1).astype(mxu_dtype)   # (9*Cin, 2*Cout)
    w2r = p["w2"].reshape(9 * Cout, Cout).astype(mxu_dtype)

    def chan(*vs):
        return jnp.concatenate([v.reshape(1, -1) for v in vs], axis=1).astype(jnp.float32)

    out2d = pl.pallas_call(
        _block_b_kernel,
        out_shape=jax.ShapeDtypeStruct((R, Cout), jnp.float32),
        in_specs=[pl.BlockSpec(memory_space=pltpu.MemorySpace.VMEM)] * 10,
        out_specs=pl.BlockSpec(memory_space=pltpu.MemorySpace.VMEM),
        scratch_shapes=[pltpu.VMEM((N, Ho + 2, Wo + 2, Cout), jnp.float32)],
    )(p00, p01, p10, p11, w13, w2r,
      chan(p["g1"], p["g3"]), chan(p["b1"], p["b3"]),
      chan(p["g2"]), chan(p["b2"]))

    out = out2d.reshape(N, Ho, Wo, Cout)
    return jnp.transpose(out, (0, 3, 1, 2))


def block_b_reference(x_nchw, p, *, emulate_kernel=False):
    """Pure-JAX reference.

    emulate_kernel=False: faithful PyTorch semantics (f32 convs, conv biases).
    emulate_kernel=True : same math as the kernel's MXU path (bf16 conv
    operands, f32 accumulation, biases dropped - exact under training-mode BN).
    """
    cdt = jnp.bfloat16 if emulate_kernel else jnp.float32

    def conv(x, w, b, stride, pad):
        y = jax.lax.conv_general_dilated(
            x.astype(cdt), w.astype(cdt),
            window_strides=(stride, stride),
            padding=((pad, pad), (pad, pad)),
            dimension_numbers=("NCHW", "HWIO", "NCHW"),
            preferred_element_type=jnp.float32)
        if not emulate_kernel:
            y = y + b.reshape(1, -1, 1, 1)
        return y

    def bn(y, g, b):
        mu = jnp.mean(y, axis=(0, 2, 3), keepdims=True)
        var = jnp.mean((y - mu) ** 2, axis=(0, 2, 3), keepdims=True)
        return ((y - mu) * jax.lax.rsqrt(var + EPS) * g.reshape(1, -1, 1, 1)
                + b.reshape(1, -1, 1, 1))

    x = x_nchw.astype(jnp.float32)
    shortcut = bn(conv(x, p["w3"], p["cb3"], 2, 0), p["g3"], p["b3"])
    y = jax.nn.relu(bn(conv(x, p["w1"], p["cb1"], 2, 1), p["g1"], p["b1"]))
    y = bn(conv(y, p["w2"], p["cb2"], 1, 1), p["g2"], p["b2"])
    return jax.nn.relu(y + shortcut)


if __name__ == "__main__":
    key = jax.random.PRNGKey(0)
    kx, kp = jax.random.split(key)

    N, Cin, H, W = 2, 4, 16, 16          # batch=2, channels=4, spatial=16 (NCHW)
    Cout = 8
    x = jax.random.normal(kx, (N, Cin, H, W), jnp.float32)
    params = init_block_b(kp, in_channels=Cin, out_channels=Cout)

    out = jax.block_until_ready(block_b_forward(x, params))
    assert out.shape == (N, Cout, H // 2, W // 2) and out.dtype == jnp.float32

    # Tight check vs a reference using the same bf16 MXU operands (and the same
    # exact bias cancellation): differences are accumulation order only.
    ref_emul = jax.block_until_ready(block_b_reference(x, params, emulate_kernel=True))
    assert jnp.allclose(out, ref_emul, atol=5e-3, rtol=5e-3), \
        "Pallas kernel mismatch vs bf16-operand reference"

    # Loose check vs the faithful f32 PyTorch-semantics reference; the gap is
    # solely the bf16 cast of conv/matmul operands (kept per perf guidance).
    ref_f32 = jax.block_until_ready(block_b_reference(x, params))
    assert jnp.allclose(out, ref_f32, atol=1e-1, rtol=1e-1), \
        "Pallas kernel mismatch vs f32 reference"

    print("KERNEL_OK")
</pallas_src>

<mosaic_0001>
module attributes {stable_mosaic.version = 11 : i64} {
  func.func @_block_b_kernel(%arg0: memref<2x9x9x4xf32, #tpu.memory_space<vmem>>, %arg1: memref<2x9x9x4xf32, #tpu.memory_space<vmem>>, %arg2: memref<2x9x9x4xf32, #tpu.memory_space<vmem>>, %arg3: memref<2x9x9x4xf32, #tpu.memory_space<vmem>>, %arg4: memref<36x16xbf16, #tpu.memory_space<vmem>>, %arg5: memref<72x8xbf16, #tpu.memory_space<vmem>>, %arg6: memref<1x16xf32, #tpu.memory_space<vmem>>, %arg7: memref<1x16xf32, #tpu.memory_space<vmem>>, %arg8: memref<1x8xf32, #tpu.memory_space<vmem>>, %arg9: memref<1x8xf32, #tpu.memory_space<vmem>>, %arg10: memref<128x8xf32, #tpu.memory_space<vmem>>, %arg11: memref<2x10x10x8xf32, #tpu.memory_space<vmem>>) attributes {dimension_semantics = [], scalar_prefetch = 0 : i64, scratch_operands = 1 : i64, tpu.core_type = #tpu.core_type<tc>} {
    %c0 = arith.constant 0 : index
    %c0_0 = arith.constant 0 : index
    %c0_1 = arith.constant 0 : index
    %c0_2 = arith.constant 0 : index
    %0 = vector.load %arg0[%c0, %c0_0, %c0_1, %c0_2] : memref<2x9x9x4xf32, #tpu.memory_space<vmem>>, vector<2x9x9x4xf32>
    %c0_3 = arith.constant 0 : index
    %c0_4 = arith.constant 0 : index
    %c0_5 = arith.constant 0 : index
    %c0_6 = arith.constant 0 : index
    %1 = vector.load %arg1[%c0_3, %c0_4, %c0_5, %c0_6] : memref<2x9x9x4xf32, #tpu.memory_space<vmem>>, vector<2x9x9x4xf32>
    %c0_7 = arith.constant 0 : index
    %c0_8 = arith.constant 0 : index
    %c0_9 = arith.constant 0 : index
    %c0_10 = arith.constant 0 : index
    %2 = vector.load %arg2[%c0_7, %c0_8, %c0_9, %c0_10] : memref<2x9x9x4xf32, #tpu.memory_space<vmem>>, vector<2x9x9x4xf32>
    %c0_11 = arith.constant 0 : index
    %c0_12 = arith.constant 0 : index
    %c0_13 = arith.constant 0 : index
    %c0_14 = arith.constant 0 : index
    %3 = vector.load %arg3[%c0_11, %c0_12, %c0_13, %c0_14] : memref<2x9x9x4xf32, #tpu.memory_space<vmem>>, vector<2x9x9x4xf32>
    %4 = vector.extract_strided_slice %0 {offsets = [0, 0, 0, 0], sizes = [2, 8, 8, 4], strides = [1, 1, 1, 1]} : vector<2x9x9x4xf32> to vector<2x8x8x4xf32>
    %5 = vector.extract_strided_slice %1 {offsets = [0, 0, 0, 0], sizes = [2, 8, 8, 4], strides = [1, 1, 1, 1]} : vector<2x9x9x4xf32> to vector<2x8x8x4xf32>
    %6 = vector.extract_strided_slice %0 {offsets = [0, 0, 1, 0], sizes = [2, 8, 8, 4], strides = [1, 1, 1, 1]} : vector<2x9x9x4xf32> to vector<2x8x8x4xf32>
    %7 = vector.extract_strided_slice %2 {offsets = [0, 0, 0, 0], sizes = [2, 8, 8, 4], strides = [1, 1, 1, 1]} : vector<2x9x9x4xf32> to vector<2x8x8x4xf32>
    %8 = vector.extract_strided_slice %3 {offsets = [0, 0, 0, 0], sizes = [2, 8, 8, 4], strides = [1, 1, 1, 1]} : vector<2x9x9x4xf32> to vector<2x8x8x4xf32>
    %9 = vector.extract_strided_slice %2 {offsets = [0, 0, 1, 0], sizes = [2, 8, 8, 4], strides = [1, 1, 1, 1]} : vector<2x9x9x4xf32> to vector<2x8x8x4xf32>
    %10 = vector.extract_strided_slice %0 {offsets = [0, 1, 0, 0], sizes = [2, 8, 8, 4], strides = [1, 1, 1, 1]} : vector<2x9x9x4xf32> to vector<2x8x8x4xf32>
    %11 = vector.extract_strided_slice %1 {offsets = [0, 1, 0, 0], sizes = [2, 8, 8, 4], strides = [1, 1, 1, 1]} : vector<2x9x9x4xf32> to vector<2x8x8x4xf32>
    %12 = vector.extract_strided_slice %0 {offsets = [0, 1, 1, 0], sizes = [2, 8, 8, 4], strides = [1, 1, 1, 1]} : vector<2x9x9x4xf32> to vector<2x8x8x4xf32>
    %13 = tpu.concatenate %4, %5, %6, %7, %8, %9, %10, %11, %12 in 3 : vector<2x8x8x4xf32>, vector<2x8x8x4xf32>, vector<2x8x8x4xf32>, vector<2x8x8x4xf32>, vector<2x8x8x4xf32>, vector<2x8x8x4xf32>, vector<2x8x8x4xf32>, vector<2x8x8x4xf32>, vector<2x8x8x4xf32> -> vector<2x8x8x36xf32>
    %14 = vector.shape_cast %13 : vector<2x8x8x36xf32> to vector<128x36xf32>
    %15 = arith.truncf %14 : vector<128x36xf32> to vector<128x36xbf16>
    %c0_15 = arith.constant 0 : index
    %c0_16 = arith.constant 0 : index
    %16 = vector.load %arg4[%c0_15, %c0_16] : memref<36x16xbf16, #tpu.memory_space<vmem>>, vector<36x16xbf16>
    %cst = arith.constant dense<0.000000e+00> : vector<128x16xf32>
    %17 = tpu.matmul %15, %16, %cst {dimension_numbers = #tpu.dot_dimension_numbers<[1], [0], [0], [1], [0, 0, 1, 1], [], []>} : vector<128x36xbf16>, vector<36x16xbf16>, vector<128x16xf32> -> vector<128x16xf32>
    %cst_17 = arith.constant dense<0.000000e+00> : vector<16xf32>
    %18 = vector.multi_reduction <add>, %17, %cst_17 [0] : vector<128x16xf32> to vector<16xf32>
    %19 = vector.shape_cast %18 : vector<16xf32> to vector<1x16xf32>
    %cst_18 = arith.constant 7.812500e-03 : f32
    %20 = vector.broadcast %cst_18 : f32 to vector<1x16xf32>
    %21 = arith.mulf %19, %20 : vector<1x16xf32>
    %22 = arith.mulf %17, %17 : vector<128x16xf32>
    %cst_19 = arith.constant dense<0.000000e+00> : vector<16xf32>
    %23 = vector.multi_reduction <add>, %22, %cst_19 [0] : vector<128x16xf32> to vector<16xf32>
    %24 = vector.shape_cast %23 : vector<16xf32> to vector<1x16xf32>
    %cst_20 = arith.constant 7.812500e-03 : f32
    %25 = vector.broadcast %cst_20 : f32 to vector<1x16xf32>
    %26 = arith.mulf %24, %25 : vector<1x16xf32>
    %27 = arith.mulf %21, %21 : vector<1x16xf32>
    %28 = arith.subf %26, %27 : vector<1x16xf32>
    %c0_21 = arith.constant 0 : index
    %c0_22 = arith.constant 0 : index
    %29 = vector.load %arg6[%c0_21, %c0_22] : memref<1x16xf32, #tpu.memory_space<vmem>>, vector<1x16xf32>
    %cst_23 = arith.constant 9.99999974E-6 : f32
    %30 = vector.broadcast %cst_23 : f32 to vector<1x16xf32>
    %31 = arith.addf %28, %30 : vector<1x16xf32>
    %32 = math.rsqrt %31 : vector<1x16xf32>
    %33 = arith.mulf %29, %32 : vector<1x16xf32>
    %c0_24 = arith.constant 0 : index
    %c0_25 = arith.constant 0 : index
    %34 = vector.load %arg7[%c0_24, %c0_25] : memref<1x16xf32, #tpu.memory_space<vmem>>, vector<1x16xf32>
    %35 = arith.mulf %21, %33 : vector<1x16xf32>
    %36 = arith.subf %34, %35 : vector<1x16xf32>
    %37 = vector.broadcast %33 : vector<1x16xf32> to vector<128x16xf32>
    %38 = arith.mulf %17, %37 : vector<128x16xf32>
    %39 = vector.broadcast %36 : vector<1x16xf32> to vector<128x16xf32>
    %40 = arith.addf %38, %39 : vector<128x16xf32>
    %41 = vector.extract_strided_slice %40 {offsets = [0, 0], sizes = [128, 8], strides = [1, 1]} : vector<128x16xf32> to vector<128x8xf32>
    %cst_26 = arith.constant 0.000000e+00 : f32
    %42 = vector.broadcast %cst_26 : f32 to vector<128x8xf32>
    %43 = arith.maximumf %41, %42 : vector<128x8xf32>
    %44 = vector.extract_strided_slice %40 {offsets = [0, 8], sizes = [128, 8], strides = [1, 1]} : vector<128x16xf32> to vector<128x8xf32>
    %cst_27 = arith.constant 0.000000e+00 : f32
    %45 = vector.broadcast %cst_27 : f32 to vector<2x1x10x8xf32>
    %c0_28 = arith.constant 0 : index
    %c0_29 = arith.constant 0 : index
    %c0_30 = arith.constant 0 : index
    %c0_31 = arith.constant 0 : index
    %46 = vector.load %arg11[%c0_28, %c0_29, %c0_30, %c0_31] : memref<2x10x10x8xf32, #tpu.memory_space<vmem>>, vector<2x1x10x8xf32>
    tpu.vector_store %arg11[%c0_28, %c0_29, %c0_30, %c0_31], %45 {strides = array<i32>} : memref<2x10x10x8xf32, #tpu.memory_space<vmem>>, vector<2x1x10x8xf32>,
    %cst_32 = arith.constant 0.000000e+00 : f32
    %47 = vector.broadcast %cst_32 : f32 to vector<2x1x10x8xf32>
    %c0_33 = arith.constant 0 : index
    %c9 = arith.constant 9 : index
    %c0_34 = arith.constant 0 : index
    %c0_35 = arith.constant 0 : index
    %48 = vector.load %arg11[%c0_33, %c9, %c0_34, %c0_35] : memref<2x10x10x8xf32, #tpu.memory_space<vmem>>, vector<2x1x10x8xf32>
    tpu.vector_store %arg11[%c0_33, %c9, %c0_34, %c0_35], %47 {strides = array<i32>} : memref<2x10x10x8xf32, #tpu.memory_space<vmem>>, vector<2x1x10x8xf32>,
    %cst_36 = arith.constant 0.000000e+00 : f32
    %49 = vector.broadcast %cst_36 : f32 to vector<2x10x1x8xf32>
    %c0_37 = arith.constant 0 : index
    %c0_38 = arith.constant 0 : index
    %c0_39 = arith.constant 0 : index
    %c0_40 = arith.constant 0 : index
    %50 = vector.load %arg11[%c0_37, %c0_38, %c0_39, %c0_40] : memref<2x10x10x8xf32, #tpu.memory_space<vmem>>, vector<2x10x1x8xf32>
    tpu.vector_store %arg11[%c0_37, %c0_38, %c0_39, %c0_40], %49 {strides = array<i32>} : memref<2x10x10x8xf32, #tpu.memory_space<vmem>>, vector<2x10x1x8xf32>,
    %cst_41 = arith.constant 0.000000e+00 : f32
    %51 = vector.broadcast %cst_41 : f32 to vector<2x10x1x8xf32>
    %c0_42 = arith.constant 0 : index
    %c0_43 = arith.constant 0 : index
    %c9_44 = arith.constant 9 : index
    %c0_45 = arith.constant 0 : index
    %52 = vector.load %arg11[%c0_42, %c0_43, %c9_44, %c0_45] : memref<2x10x10x8xf32, #tpu.memory_space<vmem>>, vector<2x10x1x8xf32>
    tpu.vector_store %arg11[%c0_42, %c0_43, %c9_44, %c0_45], %51 {strides = array<i32>} : memref<2x10x10x8xf32, #tpu.memory_space<vmem>>, vector<2x10x1x8xf32>,
    %53 = vector.shape_cast %43 : vector<128x8xf32> to vector<2x8x8x8xf32>
    %c0_46 = arith.constant 0 : index
    %c1 = arith.constant 1 : index
    %c1_47 = arith.constant 1 : index
    %c0_48 = arith.constant 0 : index
    %54 = vector.load %arg11[%c0_46, %c1, %c1_47, %c0_48] : memref<2x10x10x8xf32, #tpu.memory_space<vmem>>, vector<2x8x8x8xf32>
    tpu.vector_store %arg11[%c0_46, %c1, %c1_47, %c0_48], %53 {strides = array<i32>} : memref<2x10x10x8xf32, #tpu.memory_space<vmem>>, vector<2x8x8x8xf32>,
    %c0_49 = arith.constant 0 : index
    %c0_50 = arith.constant 0 : index
    %c0_51 = arith.constant 0 : index
    %c0_52 = arith.constant 0 : index
    %55 = vector.load %arg11[%c0_49, %c0_50, %c0_51, %c0_52] : memref<2x10x10x8xf32, #tpu.memory_space<vmem>>, vector<2x10x10x8xf32>
    %56 = vector.extract_strided_slice %55 {offsets = [0, 0, 0, 0], sizes = [2, 10, 8, 8], strides = [1, 1, 1, 1]} : vector<2x10x10x8xf32> to vector<2x10x8x8xf32>
    %57 = vector.extract_strided_slice %55 {offsets = [0, 0, 1, 0], sizes = [2, 10, 8, 8], strides = [1, 1, 1, 1]} : vector<2x10x10x8xf32> to vector<2x10x8x8xf32>
    %58 = vector.extract_strided_slice %55 {offsets = [0, 0, 2, 0], sizes = [2, 10, 8, 8], strides = [1, 1, 1, 1]} : vector<2x10x10x8xf32> to vector<2x10x8x8xf32>
    %59 = vector.extract_strided_slice %56 {offsets = [0, 0, 0, 0], sizes = [2, 8, 8, 8], strides = [1, 1, 1, 1]} : vector<2x10x8x8xf32> to vector<2x8x8x8xf32>
    %60 = vector.extract_strided_slice %57 {offsets = [0, 0, 0, 0], sizes = [2, 8, 8, 8], strides = [1, 1, 1, 1]} : vector<2x10x8x8xf32> to vector<2x8x8x8xf32>
    %61 = vector.extract_strided_slice %58 {offsets = [0, 0, 0, 0], sizes = [2, 8, 8, 8], strides = [1, 1, 1, 1]} : vector<2x10x8x8xf32> to vector<2x8x8x8xf32>
    %62 = vector.extract_strided_slice %56 {offsets = [0, 1, 0, 0], sizes = [2, 8, 8, 8], strides = [1, 1, 1, 1]} : vector<2x10x8x8xf32> to vector<2x8x8x8xf32>
    %63 = vector.extract_strided_slice %57 {offsets = [0, 1, 0, 0], sizes = [2, 8, 8, 8], strides = [1, 1, 1, 1]} : vector<2x10x8x8xf32> to vector<2x8x8x8xf32>
    %64 = vector.extract_strided_slice %58 {offsets = [0, 1, 0, 0], sizes = [2, 8, 8, 8], strides = [1, 1, 1, 1]} : vector<2x10x8x8xf32> to vector<2x8x8x8xf32>
    %65 = vector.extract_strided_slice %56 {offsets = [0, 2, 0, 0], sizes = [2, 8, 8, 8], strides = [1, 1, 1, 1]} : vector<2x10x8x8xf32> to vector<2x8x8x8xf32>
    %66 = vector.extract_strided_slice %57 {offsets = [0, 2, 0, 0], sizes = [2, 8, 8, 8], strides = [1, 1, 1, 1]} : vector<2x10x8x8xf32> to vector<2x8x8x8xf32>
    %67 = vector.extract_strided_slice %58 {offsets = [0, 2, 0, 0], sizes = [2, 8, 8, 8], strides = [1, 1, 1, 1]} : vector<2x10x8x8xf32> to vector<2x8x8x8xf32>
    %68 = tpu.concatenate %59, %60, %61, %62, %63, %64, %65, %66, %67 in 3 : vector<2x8x8x8xf32>, vector<2x8x8x8xf32>, vector<2x8x8x8xf32>, vector<2x8x8x8xf32>, vector<2x8x8x8xf32>, vector<2x8x8x8xf32>, vector<2x8x8x8xf32>, vector<2x8x8x8xf32>, vector<2x8x8x8xf32> -> vector<2x8x8x72xf32>
    %69 = vector.shape_cast %68 : vector<2x8x8x72xf32> to vector<128x72xf32>
    %70 = arith.truncf %69 : vector<128x72xf32> to vector<128x72xbf16>
    %c0_53 = arith.constant 0 : index
    %c0_54 = arith.constant 0 : index
    %71 = vector.load %arg5[%c0_53, %c0_54] : memref<72x8xbf16, #tpu.memory_space<vmem>>, vector<72x8xbf16>
    %cst_55 = arith.constant dense<0.000000e+00> : vector<128x8xf32>
    %72 = tpu.matmul %70, %71, %cst_55 {dimension_numbers = #tpu.dot_dimension_numbers<[1], [0], [0], [1], [0, 0, 1, 1], [], []>} : vector<128x72xbf16>, vector<72x8xbf16>, vector<128x8xf32> -> vector<128x8xf32>
    %cst_56 = arith.constant dense<0.000000e+00> : vector<8xf32>
    %73 = vector.multi_reduction <add>, %72, %cst_56 [0] : vector<128x8xf32> to vector<8xf32>
    %74 = vector.shape_cast %73 : vector<8xf32> to vector<1x8xf32>
    %cst_57 = arith.constant 7.812500e-03 : f32
    %75 = vector.broadcast %cst_57 : f32 to vector<1x8xf32>
    %76 = arith.mulf %74, %75 : vector<1x8xf32>
    %77 = arith.mulf %72, %72 : vector<128x8xf32>
    %cst_58 = arith.constant dense<0.000000e+00> : vector<8xf32>
    %78 = vector.multi_reduction <add>, %77, %cst_58 [0] : vector<128x8xf32> to vector<8xf32>
    %79 = vector.shape_cast %78 : vector<8xf32> to vector<1x8xf32>
    %cst_59 = arith.constant 7.812500e-03 : f32
    %80 = vector.broadcast %cst_59 : f32 to vector<1x8xf32>
    %81 = arith.mulf %79, %80 : vector<1x8xf32>
    %82 = arith.mulf %76, %76 : vector<1x8xf32>
    %83 = arith.subf %81, %82 : vector<1x8xf32>
    %c0_60 = arith.constant 0 : index
    %c0_61 = arith.constant 0 : index
    %84 = vector.load %arg8[%c0_60, %c0_61] : memref<1x8xf32, #tpu.memory_space<vmem>>, vector<1x8xf32>
    %cst_62 = arith.constant 9.99999974E-6 : f32
    %85 = vector.broadcast %cst_62 : f32 to vector<1x8xf32>
    %86 = arith.addf %83, %85 : vector<1x8xf32>
    %87 = math.rsqrt %86 : vector<1x8xf32>
    %88 = arith.mulf %84, %87 : vector<1x8xf32>
    %c0_63 = arith.constant 0 : index
    %c0_64 = arith.constant 0 : index
    %89 = vector.load %arg9[%c0_63, %c0_64] : memref<1x8xf32, #tpu.memory_space<vmem>>, vector<1x8xf32>
    %90 = arith.mulf %76, %88 : vector<1x8xf32>
    %91 = arith.subf %89, %90 : vector<1x8xf32>
    %92 = vector.broadcast %88 : vector<1x8xf32> to vector<128x8xf32>
    %93 = arith.mulf %72, %92 : vector<128x8xf32>
    %94 = vector.broadcast %91 : vector<1x8xf32> to vector<128x8xf32>
    %95 = arith.addf %93, %94 : vector<128x8xf32>
    %96 = arith.addf %95, %44 : vector<128x8xf32>
    %cst_65 = arith.constant 0.000000e+00 : f32
    %97 = vector.broadcast %cst_65 : f32 to vector<128x8xf32>
    %98 = arith.maximumf %96, %97 : vector<128x8xf32>
    %c0_66 = arith.constant 0 : index
    %c0_67 = arith.constant 0 : index
    %99 = vector.load %arg10[%c0_66, %c0_67] : memref<128x8xf32, #tpu.memory_space<vmem>>, vector<128x8xf32>
    tpu.vector_store %arg10[%c0_66, %c0_67], %98 {strides = array<i32>} : memref<128x8xf32, #tpu.memory_space<vmem>>, vector<128x8xf32>,
    return
  }
}

</mosaic_0001>

<llo_original>
// kernel: tpu_custom_call.1
$region0: #{tpu_custom_call.1}
  #allocation0 [shape = 'u32[]', space=smem, size = 0x4, offset = 0x4, fixed_abs, tag = 'smem constant byte address 0x4 - core index']
  #allocation1 [shape = 'u32[144,128]{1,0:T(1,128)}', space=vmem, size = 0x12000, scoped, tag = 'internal scratch']
  #allocation2 [shape = 'f32[2,10,10,8]{3,2,1,0:T(8,128)}', space=vmem, size = 0x28000, scoped, tag = 'scratch operand']
  %s0 = inlined_call_operand.vmem [shape: f32[2,9,9,4], index: 0, kind: input, shape index: {}]
  %s1 = inlined_call_operand.vmem [shape: f32[2,9,9,4], index: 1, kind: input, shape index: {}]
  %s2 = inlined_call_operand.vmem [shape: f32[2,9,9,4], index: 2, kind: input, shape index: {}]
  %s3 = inlined_call_operand.vmem [shape: f32[2,9,9,4], index: 3, kind: input, shape index: {}]
  %s4 = inlined_call_operand.vmem [shape: bf16[36,16], index: 4, kind: input, shape index: {}]
  %s5 = inlined_call_operand.vmem [shape: bf16[72,8], index: 5, kind: input, shape index: {}]
  %s6 = inlined_call_operand.vmem [shape: f32[1,16], index: 6, kind: input, shape index: {}]
  %s7 = inlined_call_operand.vmem [shape: f32[1,16], index: 7, kind: input, shape index: {}]
  %s8 = inlined_call_operand.vmem [shape: f32[1,8], index: 8, kind: input, shape index: {}]
  %s9 = inlined_call_operand.vmem [shape: f32[1,8], index: 9, kind: input, shape index: {}]
  %s10 = inlined_call_operand.vmem [shape: f32[128,8], index: 10, kind: output, shape index: {}]
  %s11 = sld [smem:[#allocation0]]
  $region50: #{tpu_custom_call.1} parent=0
    _
  %s13 = ssub.s32 1, %s11
  %s14 = scalar_select 0, %s13, %s11
  // Predicated region
  $region2: #{tpu_custom_call.1} parent=0 // pred_check
    _
  $region3: #{tpu_custom_call.1} parent=0 // pred_check_branch
    %16 = sbr.rel (0) target = $region5
  $region4: #{tpu_custom_call.1} parent=0 // pred_region
    _
  $region5: #{tpu_custom_call.1} parent=0 // pred_fallthru
    _
  // Predicated region
  $region6: #{tpu_custom_call.1} parent=0 // pred_check
    _
  $region7: #{tpu_custom_call.1} parent=0 // pred_check_branch
    %18 = sbr.rel (0) target = $region9
  $region8: #{tpu_custom_call.1} parent=0 // pred_region
    _
  $region9: #{tpu_custom_call.1} parent=0 // pred_fallthru
    _
  // Predicated region
  $region10: #{tpu_custom_call.1} parent=0 // pred_check
    _
  $region11: #{tpu_custom_call.1} parent=0 // pred_check_branch
    %20 = sbr.rel (0) target = $region13
  $region12: #{tpu_custom_call.1} parent=0 // pred_region
    _
  $region13: #{tpu_custom_call.1} parent=0 // pred_fallthru
    _
  // Predicated region
  $region14: #{tpu_custom_call.1} parent=0 // pred_check
    _
  $region15: #{tpu_custom_call.1} parent=0 // pred_check_branch
    %22 = sbr.rel (0) target = $region17
  $region16: #{tpu_custom_call.1} parent=0 // pred_region
    _
  $region17: #{tpu_custom_call.1} parent=0 // pred_fallthru
    _
  // Predicated region
  $region18: #{tpu_custom_call.1} parent=0 // pred_check
    _
  $region19: #{tpu_custom_call.1} parent=0 // pred_check_branch
    %24 = sbr.rel (0) target = $region21
  $region20: #{tpu_custom_call.1} parent=0 // pred_region
    _
  $region21: #{tpu_custom_call.1} parent=0 // pred_fallthru
    _
  // Predicated region
  $region22: #{tpu_custom_call.1} parent=0 // pred_check
    _
  $region23: #{tpu_custom_call.1} parent=0 // pred_check_branch
    %26 = sbr.rel (0) target = $region25
  $region24: #{tpu_custom_call.1} parent=0 // pred_region
    _
  $region25: #{tpu_custom_call.1} parent=0 // pred_fallthru
    _
  // Predicated region
  $region26: #{tpu_custom_call.1} parent=0 // pred_check
    _
  $region27: #{tpu_custom_call.1} parent=0 // pred_check_branch
    %28 = sbr.rel (0) target = $region29
  $region28: #{tpu_custom_call.1} parent=0 // pred_region
    _
  $region29: #{tpu_custom_call.1} parent=0 // pred_fallthru
    _
  // Predicated region
  $region30: #{tpu_custom_call.1} parent=0 // pred_check
    _
  $region31: #{tpu_custom_call.1} parent=0 // pred_check_branch
    %30 = sbr.rel (0) target = $region33
  $region32: #{tpu_custom_call.1} parent=0 // pred_region
    _
  $region33: #{tpu_custom_call.1} parent=0 // pred_fallthru
    _
  // Predicated region
  $region34: #{tpu_custom_call.1} parent=0 // pred_check
    _
  $region35: #{tpu_custom_call.1} parent=0 // pred_check_branch
    %32 = sbr.rel (0) target = $region37
  $region36: #{tpu_custom_call.1} parent=0 // pred_region
    _
  $region37: #{tpu_custom_call.1} parent=0 // pred_fallthru
    _
  // Predicated region
  $region38: #{tpu_custom_call.1} parent=0 // pred_check
    _
  $region39: #{tpu_custom_call.1} parent=0 // pred_check_branch
    %34 = sbr.rel (0) target = $region41
  $region40: #{tpu_custom_call.1} parent=0 // pred_region
    _
  $region41: #{tpu_custom_call.1} parent=0 // pred_fallthru
    _
  %v36 = vld [vmem:[%s0] sm:$0xff]
  %v37 = vld [vmem:[%s0 + $0x8] sm:$0x1]
  %v38 = vld [vmem:[%s0 + $0x10] sm:$0xff]
  %v39 = vld [vmem:[%s0 + $0x18] sm:$0x1]
  %v40 = vld [vmem:[%s0 + $0x20] sm:$0xff]
  %v41 = vld [vmem:[%s0 + $0x28] sm:$0x1]
  %v42 = vld [vmem:[%s0 + $0x30] sm:$0xff]
  %v43 = vld [vmem:[%s0 + $0x38] sm:$0x1]
  %v44 = vld [vmem:[%s0 + $0x40] sm:$0xff]
  %v45 = vld [vmem:[%s0 + $0x48] sm:$0x1]
  %v46 = vld [vmem:[%s0 + $0x50] sm:$0xff]
  %v47 = vld [vmem:[%s0 + $0x58] sm:$0x1]
  %v48 = vld [vmem:[%s0 + $0x60] sm:$0xff]
  %v49 = vld [vmem:[%s0 + $0x68] sm:$0x1]
  %v50 = vld [vmem:[%s0 + $0x70] sm:$0xff]
  %v51 = vld [vmem:[%s0 + $0x78] sm:$0x1]
  %v52 = vld [vmem:[%s0 + $0x80] sm:$0xff]
  %v53 = vld [vmem:[%s0 + $0x88] sm:$0x1]
  %v54 = vld [vmem:[%s0 + $0x90] sm:$0xff]
  %v55 = vld [vmem:[%s0 + $0x98] sm:$0x1]
  %v56 = vld [vmem:[%s0 + $0xa0] sm:$0xff]
  %v57 = vld [vmem:[%s0 + $0xa8] sm:$0x1]
  %v58 = vld [vmem:[%s0 + $0xb0] sm:$0xff]
  %v59 = vld [vmem:[%s0 + $0xb8] sm:$0x1]
  %v60 = vld [vmem:[%s0 + $0xc0] sm:$0xff]
  %v61 = vld [vmem:[%s0 + $0xc8] sm:$0x1]
  %v62 = vld [vmem:[%s0 + $0xd0] sm:$0xff]
  %v63 = vld [vmem:[%s0 + $0xd8] sm:$0x1]
  %v64 = vld [vmem:[%s0 + $0xe0] sm:$0xff]
  %v65 = vld [vmem:[%s0 + $0xe8] sm:$0x1]
  %v66 = vld [vmem:[%s0 + $0xf0] sm:$0xff]
  %v67 = vld [vmem:[%s0 + $0xf8] sm:$0x1]
  %v68 = vld [vmem:[%s0 + $0x100] sm:$0xff]
  %v69 = vld [vmem:[%s0 + $0x108] sm:$0x1]
  %v70 = vld [vmem:[%s0 + $0x110] sm:$0xff]
  %v71 = vld [vmem:[%s0 + $0x118] sm:$0x1]
  %v72 = vld [vmem:[%s1] sm:$0xff]
  %v73 = vld [vmem:[%s1 + $0x10] sm:$0xff]
  %v74 = vld [vmem:[%s1 + $0x20] sm:$0xff]
  %v75 = vld [vmem:[%s1 + $0x30] sm:$0xff]
  %v76 = vld [vmem:[%s1 + $0x40] sm:$0xff]
  %v77 = vld [vmem:[%s1 + $0x50] sm:$0xff]
  %v78 = vld [vmem:[%s1 + $0x60] sm:$0xff]
  %v79 = vld [vmem:[%s1 + $0x70] sm:$0xff]
  %v80 = vld [vmem:[%s1 + $0x80] sm:$0xff]
  %v81 = vld [vmem:[%s1 + $0x90] sm:$0xff]
  %v82 = vld [vmem:[%s1 + $0xa0] sm:$0xff]
  %v83 = vld [vmem:[%s1 + $0xb0] sm:$0xff]
  %v84 = vld [vmem:[%s1 + $0xc0] sm:$0xff]
  %v85 = vld [vmem:[%s1 + $0xd0] sm:$0xff]
  %v86 = vld [vmem:[%s1 + $0xe0] sm:$0xff]
  %v87 = vld [vmem:[%s1 + $0xf0] sm:$0xff]
  %v88 = vld [vmem:[%s1 + $0x100] sm:$0xff]
  %v89 = vld [vmem:[%s1 + $0x110] sm:$0xff]
  %v90 = vld [vmem:[%s2] sm:$0xff]
  %v91 = vld [vmem:[%s2 + $0x8] sm:$0x1]
  %v92 = vld [vmem:[%s2 + $0x10] sm:$0xff]
  %v93 = vld [vmem:[%s2 + $0x18] sm:$0x1]
  %v94 = vld [vmem:[%s2 + $0x20] sm:$0xff]
  %v95 = vld [vmem:[%s2 + $0x28] sm:$0x1]
  %v96 = vld [vmem:[%s2 + $0x30] sm:$0xff]
  %v97 = vld [vmem:[%s2 + $0x38] sm:$0x1]
  %v98 = vld [vmem:[%s2 + $0x40] sm:$0xff]
  %v99 = vld [vmem:[%s2 + $0x48] sm:$0x1]
  %v100 = vld [vmem:[%s2 + $0x50] sm:$0xff]
  %v101 = vld [vmem:[%s2 + $0x58] sm:$0x1]
  %v102 = vld [vmem:[%s2 + $0x60] sm:$0xff]
  %v103 = vld [vmem:[%s2 + $0x68] sm:$0x1]
  %v104 = vld [vmem:[%s2 + $0x70] sm:$0xff]
  %v105 = vld [vmem:[%s2 + $0x78] sm:$0x1]
  %v106 = vld [vmem:[%s2 + $0x90] sm:$0xff]
  %v107 = vld [vmem:[%s2 + $0x98] sm:$0x1]
  %v108 = vld [vmem:[%s2 + $0xa0] sm:$0xff]
  %v109 = vld [vmem:[%s2 + $0xa8] sm:$0x1]
  %v110 = vld [vmem:[%s2 + $0xb0] sm:$0xff]
  %v111 = vld [vmem:[%s2 + $0xb8] sm:$0x1]
  %v112 = vld [vmem:[%s2 + $0xc0] sm:$0xff]
  %v113 = vld [vmem:[%s2 + $0xc8] sm:$0x1]
  %v114 = vld [vmem:[%s2 + $0xd0] sm:$0xff]
  %v115 = vld [vmem:[%s2 + $0xd8] sm:$0x1]
  %v116 = vld [vmem:[%s2 + $0xe0] sm:$0xff]
  %v117 = vld [vmem:[%s2 + $0xe8] sm:$0x1]
  %v118 = vld [vmem:[%s2 + $0xf0] sm:$0xff]
  %v119 = vld [vmem:[%s2 + $0xf8] sm:$0x1]
  %v120 = vld [vmem:[%s2 + $0x100] sm:$0xff]
  %v121 = vld [vmem:[%s2 + $0x108] sm:$0x1]
  %v122 = vld [vmem:[%s3] sm:$0xff]
  %v123 = vld [vmem:[%s3 + $0x10] sm:$0xff]
  %v124 = vld [vmem:[%s3 + $0x20] sm:$0xff]
  %v125 = vld [vmem:[%s3 + $0x30] sm:$0xff]
  %v126 = vld [vmem:[%s3 + $0x40] sm:$0xff]
  %v127 = vld [vmem:[%s3 + $0x50] sm:$0xff]
  %v128 = vld [vmem:[%s3 + $0x60] sm:$0xff]
  %v129 = vld [vmem:[%s3 + $0x70] sm:$0xff]
  %v130 = vld [vmem:[%s3 + $0x90] sm:$0xff]
  %v131 = vld [vmem:[%s3 + $0xa0] sm:$0xff]
  %v132 = vld [vmem:[%s3 + $0xb0] sm:$0xff]
  %v133 = vld [vmem:[%s3 + $0xc0] sm:$0xff]
  %v134 = vld [vmem:[%s3 + $0xd0] sm:$0xff]
  %v135 = vld [vmem:[%s3 + $0xe0] sm:$0xff]
  %v136 = vld [vmem:[%s3 + $0xf0] sm:$0xff]
  %v137 = vld [vmem:[%s3 + $0x100] sm:$0xff]
  %154 = vrot.lane.b32.xlu0 %v72, 4
  %v155 = vpop.permute.xlu0 %154
  %156 = vrot.lane.b32.xlu0 %v73, 4
  %v157 = vpop.permute.xlu0 %156
  %158 = vrot.lane.b32.xlu0 %v74, 4
  %v159 = vpop.permute.xlu0 %158
  %160 = vrot.lane.b32.xlu0 %v75, 4
  %v161 = vpop.permute.xlu0 %160
  %162 = vrot.lane.b32.xlu0 %v76, 4
  %v163 = vpop.permute.xlu0 %162
  %164 = vrot.lane.b32.xlu0 %v77, 4
  %v165 = vpop.permute.xlu0 %164
  %166 = vrot.lane.b32.xlu0 %v78, 4
  %v167 = vpop.permute.xlu0 %166
  %168 = vrot.lane.b32.xlu0 %v79, 4
  %v169 = vpop.permute.xlu0 %168
  %170 = vrot.lane.b32.xlu0 %v81, 4
  %v171 = vpop.permute.xlu0 %170
  %172 = vrot.lane.b32.xlu0 %v82, 4
  %v173 = vpop.permute.xlu0 %172
  %174 = vrot.lane.b32.xlu0 %v83, 4
  %v175 = vpop.permute.xlu0 %174
  %176 = vrot.lane.b32.xlu0 %v84, 4
  %v177 = vpop.permute.xlu0 %176
  %178 = vrot.lane.b32.xlu0 %v85, 4
  %v179 = vpop.permute.xlu0 %178
  %180 = vrot.lane.b32.xlu0 %v86, 4
  %v181 = vpop.permute.xlu0 %180
  %182 = vrot.lane.b32.xlu0 %v87, 4
  %v183 = vpop.permute.xlu0 %182
  %184 = vrot.lane.b32.xlu0 %v88, 4
  %v185 = vpop.permute.xlu0 %184
  %vm234 = vcmask 1046528
  %v235 = vrot.slane %v36, 1
  %v236 = vrot.slane %v37, 1
  %v237 = vsel %vm234, %v235, %v236
  %v238 = vrot.slane %v38, 1
  %v239 = vrot.slane %v39, 1
  %v240 = vsel %vm234, %v238, %v239
  %v241 = vrot.slane %v40, 1
  %v242 = vrot.slane %v41, 1
  %v243 = vsel %vm234, %v241, %v242
  %v244 = vrot.slane %v42, 1
  %v245 = vrot.slane %v43, 1
  %v246 = vsel %vm234, %v244, %v245
  %v247 = vrot.slane %v44, 1
  %v248 = vrot.slane %v45, 1
  %v249 = vsel %vm234, %v247, %v248
  %v250 = vrot.slane %v46, 1
  %v251 = vrot.slane %v47, 1
  %v252 = vsel %vm234, %v250, %v251
  %v253 = vrot.slane %v48, 1
  %v254 = vrot.slane %v49, 1
  %v255 = vsel %vm234, %v253, %v254
  %v256 = vrot.slane %v50, 1
  %v257 = vrot.slane %v51, 1
  %v258 = vsel %vm234, %v256, %v257
  %v259 = vrot.slane %v54, 1
  %v260 = vrot.slane %v55, 1
  %v261 = vsel %vm234, %v259, %v260
  %v262 = vrot.slane %v56, 1
  %v263 = vrot.slane %v57, 1
  %v264 = vsel %vm234, %v262, %v263
  %v265 = vrot.slane %v58, 1
  %v266 = vrot.slane %v59, 1
  %v267 = vsel %vm234, %v265, %v266
  %v268 = vrot.slane %v60, 1
  %v269 = vrot.slane %v61, 1
  %v270 = vsel %vm234, %v268, %v269
  %v271 = vrot.slane %v62, 1
  %v272 = vrot.slane %v63, 1
  %v273 = vsel %vm234, %v271, %v272
  %v274 = vrot.slane %v64, 1
  %v275 = vrot.slane %v65, 1
  %v276 = vsel %vm234, %v274, %v275
  %v277 = vrot.slane %v66, 1
  %v278 = vrot.slane %v67, 1
  %v279 = vsel %vm234, %v277, %v278
  %v280 = vrot.slane %v68, 1
  %v281 = vrot.slane %v69, 1
  %v282 = vsel %vm234, %v280, %v281
  %283 = vrot.lane.b32.xlu0 %v237, 8
  %v284 = vpop.permute.xlu0 %283
  %285 = vrot.lane.b32.xlu0 %v240, 8
  %v286 = vpop.permute.xlu0 %285
  %287 = vrot.lane.b32.xlu0 %v243, 8
  %v288 = vpop.permute.xlu0 %287
  %289 = vrot.lane.b32.xlu0 %v246, 8
  %v290 = vpop.permute.xlu0 %289
  %291 = vrot.lane.b32.xlu0 %v249, 8
  %v292 = vpop.permute.xlu0 %291
  %293 = vrot.lane.b32.xlu0 %v252, 8
  %v294 = vpop.permute.xlu0 %293
  %295 = vrot.lane.b32.xlu0 %v255, 8
  %v296 = vpop.permute.xlu0 %295
  %297 = vrot.lane.b32.xlu0 %v258, 8
  %v298 = vpop.permute.xlu0 %297
  %299 = vrot.lane.b32.xlu0 %v261, 8
  %v300 = vpop.permute.xlu0 %299
  %301 = vrot.lane.b32.xlu0 %v264, 8
  %v302 = vpop.permute.xlu0 %301
  %303 = vrot.lane.b32.xlu0 %v267, 8
  %v304 = vpop.permute.xlu0 %303
  %305 = vrot.lane.b32.xlu0 %v270, 8
  %v306 = vpop.permute.xlu0 %305
  %307 = vrot.lane.b32.xlu0 %v273, 8
  %v308 = vpop.permute.xlu0 %307
  %309 = vrot.lane.b32.xlu0 %v276, 8
  %v310 = vpop.permute.xlu0 %309
  %311 = vrot.lane.b32.xlu0 %v279, 8
  %v312 = vpop.permute.xlu0 %311
  %313 = vrot.lane.b32.xlu0 %v282, 8
  %v314 = vpop.permute.xlu0 %313
  %347 = vrot.lane.b32.xlu0 %v90, 12
  %v348 = vpop.permute.xlu0 %347
  %349 = vrot.lane.b32.xlu0 %v92, 12
  %v350 = vpop.permute.xlu0 %349
  %351 = vrot.lane.b32.xlu0 %v94, 12
  %v352 = vpop.permute.xlu0 %351
  %353 = vrot.lane.b32.xlu0 %v96, 12
  %v354 = vpop.permute.xlu0 %353
  %355 = vrot.lane.b32.xlu0 %v98, 12
  %v356 = vpop.permute.xlu0 %355
  %357 = vrot.lane.b32.xlu0 %v100, 12
  %v358 = vpop.permute.xlu0 %357
  %359 = vrot.lane.b32.xlu0 %v102, 12
  %v360 = vpop.permute.xlu0 %359
  %361 = vrot.lane.b32.xlu0 %v104, 12
  %v362 = vpop.permute.xlu0 %361
  %363 = vrot.lane.b32.xlu0 %v106, 12
  %v364 = vpop.permute.xlu0 %363
  %365 = vrot.lane.b32.xlu0 %v108, 12
  %v366 = vpop.permute.xlu0 %365
  %367 = vrot.lane.b32.xlu0 %v110, 12
  %v368 = vpop.permute.xlu0 %367
  %369 = vrot.lane.b32.xlu0 %v112, 12
  %v370 = vpop.permute.xlu0 %369
  %371 = vrot.lane.b32.xlu0 %v114, 12
  %v372 = vpop.permute.xlu0 %371
  %373 = vrot.lane.b32.xlu0 %v116, 12
  %v374 = vpop.permute.xlu0 %373
  %375 = vrot.lane.b32.xlu0 %v118, 12
  %v376 = vpop.permute.xlu0 %375
  %377 = vrot.lane.b32.xlu0 %v120, 12
  %v378 = vpop.permute.xlu0 %377
  %411 = vrot.lane.b32.xlu0 %v122, 16
  %v412 = vpop.permute.xlu0 %411
  %413 = vrot.lane.b32.xlu0 %v123, 16
  %v414 = vpop.permute.xlu0 %413
  %415 = vrot.lane.b32.xlu0 %v124, 16
  %v416 = vpop.permute.xlu0 %415
  %417 = vrot.lane.b32.xlu0 %v125, 16
  %v418 = vpop.permute.xlu0 %417
  %419 = vrot.lane.b32.xlu0 %v126, 16
  %v420 = vpop.permute.xlu0 %419
  %421 = vrot.lane.b32.xlu0 %v127, 16
  %v422 = vpop.permute.xlu0 %421
  %423 = vrot.lane.b32.xlu0 %v128, 16
  %v424 = vpop.permute.xlu0 %423
  %425 = vrot.lane.b32.xlu0 %v129, 16
  %v426 = vpop.permute.xlu0 %425
  %427 = vrot.lane.b32.xlu0 %v130, 16
  %v428 = vpop.permute.xlu0 %427
  %429 = vrot.lane.b32.xlu0 %v131, 16
  %v430 = vpop.permute.xlu0 %429
  %431 = vrot.lane.b32.xlu0 %v132, 16
  %v432 = vpop.permute.xlu0 %431
  %433 = vrot.lane.b32.xlu0 %v133, 16
  %v434 = vpop.permute.xlu0 %433
  %435 = vrot.lane.b32.xlu0 %v134, 16
  %v436 = vpop.permute.xlu0 %435
  %437 = vrot.lane.b32.xlu0 %v135, 16
  %v438 = vpop.permute.xlu0 %437
  %439 = vrot.lane.b32.xlu0 %v136, 16
  %v440 = vpop.permute.xlu0 %439
  %441 = vrot.lane.b32.xlu0 %v137, 16
  %v442 = vpop.permute.xlu0 %441
  %v475 = vrot.slane %v90, 1
  %v476 = vrot.slane %v91, 1
  %v477 = vsel %vm234, %v475, %v476
  %v478 = vrot.slane %v92, 1
  %v479 = vrot.slane %v93, 1
  %v480 = vsel %vm234, %v478, %v479
  %v481 = vrot.slane %v94, 1
  %v482 = vrot.slane %v95, 1
  %v483 = vsel %vm234, %v481, %v482
  %v484 = vrot.slane %v96, 1
  %v485 = vrot.slane %v97, 1
  %v486 = vsel %vm234, %v484, %v485
  %v487 = vrot.slane %v98, 1
  %v488 = vrot.slane %v99, 1
  %v489 = vsel %vm234, %v487, %v488
  %v490 = vrot.slane %v100, 1
  %v491 = vrot.slane %v101, 1
  %v492 = vsel %vm234, %v490, %v491
  %v493 = vrot.slane %v102, 1
  %v494 = vrot.slane %v103, 1
  %v495 = vsel %vm234, %v493, %v494
  %v496 = vrot.slane %v104, 1
  %v497 = vrot.slane %v105, 1
  %v498 = vsel %vm234, %v496, %v497
  %v499 = vrot.slane %v106, 1
  %v500 = vrot.slane %v107, 1
  %v501 = vsel %vm234, %v499, %v500
  %v502 = vrot.slane %v108, 1
  %v503 = vrot.slane %v109, 1
  %v504 = vsel %vm234, %v502, %v503
  %v505 = vrot.slane %v110, 1
  %v506 = vrot.slane %v111, 1
  %v507 = vsel %vm234, %v505, %v506
  %v508 = vrot.slane %v112, 1
  %v509 = vrot.slane %v113, 1
  %v510 = vsel %vm234, %v508, %v509
  %v511 = vrot.slane %v114, 1
  %v512 = vrot.slane %v115, 1
  %v513 = vsel %vm234, %v511, %v512
  %v514 = vrot.slane %v116, 1
  %v515 = vrot.slane %v117, 1
  %v516 = vsel %vm234, %v514, %v515
  %v517 = vrot.slane %v118, 1
  %v518 = vrot.slane %v119, 1
  %v519 = vsel %vm234, %v517, %v518
  %v520 = vrot.slane %v120, 1
  %v521 = vrot.slane %v121, 1
  %v522 = vsel %vm234, %v520, %v521
  %523 = vrot.lane.b32.xlu0 %v477, 20
  %v524 = vpop.permute.xlu0 %523
  %525 = vrot.lane.b32.xlu0 %v480, 20
  %v526 = vpop.permute.xlu0 %525
  %527 = vrot.lane.b32.xlu0 %v483, 20
  %v528 = vpop.permute.xlu0 %527
  %529 = vrot.lane.b32.xlu0 %v486, 20
  %v530 = vpop.permute.xlu0 %529
  %531 = vrot.lane.b32.xlu0 %v489, 20
  %v532 = vpop.permute.xlu0 %531
  %533 = vrot.lane.b32.xlu0 %v492, 20
  %v534 = vpop.permute.xlu0 %533
  %535 = vrot.lane.b32.xlu0 %v495, 20
  %v536 = vpop.permute.xlu0 %535
  %537 = vrot.lane.b32.xlu0 %v498, 20
  %v538 = vpop.permute.xlu0 %537
  %539 = vrot.lane.b32.xlu0 %v501, 20
  %v540 = vpop.permute.xlu0 %539
  %541 = vrot.lane.b32.xlu0 %v504, 20
  %v542 = vpop.permute.xlu0 %541
  %543 = vrot.lane.b32.xlu0 %v507, 20
  %v544 = vpop.permute.xlu0 %543
  %545 = vrot.lane.b32.xlu0 %v510, 20
  %v546 = vpop.permute.xlu0 %545
  %547 = vrot.lane.b32.xlu0 %v513, 20
  %v548 = vpop.permute.xlu0 %547
  %549 = vrot.lane.b32.xlu0 %v516, 20
  %v550 = vpop.permute.xlu0 %549
  %551 = vrot.lane.b32.xlu0 %v519, 20
  %v552 = vpop.permute.xlu0 %551
  %553 = vrot.lane.b32.xlu0 %v522, 20
  %v554 = vpop.permute.xlu0 %553
  %573 = vrot.lane.b32.xlu0 %v38, 24
  %v574 = vpop.permute.xlu0 %573
  %575 = vrot.lane.b32.xlu0 %v40, 24
  %v576 = vpop.permute.xlu0 %575
  %577 = vrot.lane.b32.xlu0 %v42, 24
  %v578 = vpop.permute.xlu0 %577
  %579 = vrot.lane.b32.xlu0 %v44, 24
  %v580 = vpop.permute.xlu0 %579
  %581 = vrot.lane.b32.xlu0 %v46, 24
  %v582 = vpop.permute.xlu0 %581
  %583 = vrot.lane.b32.xlu0 %v48, 24
  %v584 = vpop.permute.xlu0 %583
  %585 = vrot.lane.b32.xlu0 %v50, 24
  %v586 = vpop.permute.xlu0 %585
  %587 = vrot.lane.b32.xlu0 %v52, 24
  %v588 = vpop.permute.xlu0 %587
  %589 = vrot.lane.b32.xlu0 %v56, 24
  %v590 = vpop.permute.xlu0 %589
  %591 = vrot.lane.b32.xlu0 %v58, 24
  %v592 = vpop.permute.xlu0 %591
  %593 = vrot.lane.b32.xlu0 %v60, 24
  %v594 = vpop.permute.xlu0 %593
  %595 = vrot.lane.b32.xlu0 %v62, 24
  %v596 = vpop.permute.xlu0 %595
  %597 = vrot.lane.b32.xlu0 %v64, 24
  %v598 = vpop.permute.xlu0 %597
  %599 = vrot.lane.b32.xlu0 %v66, 24
  %v600 = vpop.permute.xlu0 %599
  %601 = vrot.lane.b32.xlu0 %v68, 24
  %v602 = vpop.permute.xlu0 %601
  %603 = vrot.lane.b32.xlu0 %v70, 24
  %v604 = vpop.permute.xlu0 %603
  %623 = vrot.lane.b32.xlu0 %v73, 28
  %v624 = vpop.permute.xlu0 %623
  %625 = vrot.lane.b32.xlu0 %v74, 28
  %v626 = vpop.permute.xlu0 %625
  %627 = vrot.lane.b32.xlu0 %v75, 28
  %v628 = vpop.permute.xlu0 %627
  %629 = vrot.lane.b32.xlu0 %v76, 28
  %v630 = vpop.permute.xlu0 %629
  %631 = vrot.lane.b32.xlu0 %v77, 28
  %v632 = vpop.permute.xlu0 %631
  %633 = vrot.lane.b32.xlu0 %v78, 28
  %v634 = vpop.permute.xlu0 %633
  %635 = vrot.lane.b32.xlu0 %v79, 28
  %v636 = vpop.permute.xlu0 %635
  %637 = vrot.lane.b32.xlu0 %v80, 28
  %v638 = vpop.permute.xlu0 %637
  %639 = vrot.lane.b32.xlu0 %v82, 28
  %v640 = vpop.permute.xlu0 %639
  %641 = vrot.lane.b32.xlu0 %v83, 28
  %v642 = vpop.permute.xlu0 %641
  %643 = vrot.lane.b32.xlu0 %v84, 28
  %v644 = vpop.permute.xlu0 %643
  %645 = vrot.lane.b32.xlu0 %v85, 28
  %v646 = vpop.permute.xlu0 %645
  %647 = vrot.lane.b32.xlu0 %v86, 28
  %v648 = vpop.permute.xlu0 %647
  %649 = vrot.lane.b32.xlu0 %v87, 28
  %v650 = vpop.permute.xlu0 %649
  %651 = vrot.lane.b32.xlu0 %v88, 28
  %v652 = vpop.permute.xlu0 %651
  %653 = vrot.lane.b32.xlu0 %v89, 28
  %v654 = vpop.permute.xlu0 %653
  %v673 = vrot.slane %v52, 1
  %v674 = vrot.slane %v53, 1
  %v675 = vsel %vm234, %v673, %v674
  %v676 = vrot.slane %v70, 1
  %v677 = vrot.slane %v71, 1
  %v678 = vsel %vm234, %v676, %v677
  %679 = vrot.lane.b32.xlu0 %v240, 32
  %v680 = vpop.permute.xlu0 %679
  %681 = vrot.lane.b32.xlu0 %v243, 32
  %v682 = vpop.permute.xlu0 %681
  %683 = vrot.lane.b32.xlu0 %v246, 32
  %v684 = vpop.permute.xlu0 %683
  %685 = vrot.lane.b32.xlu0 %v249, 32
  %v686 = vpop.permute.xlu0 %685
  %687 = vrot.lane.b32.xlu0 %v252, 32
  %v688 = vpop.permute.xlu0 %687
  %689 = vrot.lane.b32.xlu0 %v255, 32
  %v690 = vpop.permute.xlu0 %689
  %691 = vrot.lane.b32.xlu0 %v258, 32
  %v692 = vpop.permute.xlu0 %691
  %693 = vrot.lane.b32.xlu0 %v675, 32
  %v694 = vpop.permute.xlu0 %693
  %695 = vrot.lane.b32.xlu0 %v264, 32
  %v696 = vpop.permute.xlu0 %695
  %697 = vrot.lane.b32.xlu0 %v267, 32
  %v698 = vpop.permute.xlu0 %697
  %699 = vrot.lane.b32.xlu0 %v270, 32
  %v700 = vpop.permute.xlu0 %699
  %701 = vrot.lane.b32.xlu0 %v273, 32
  %v702 = vpop.permute.xlu0 %701
  %703 = vrot.lane.b32.xlu0 %v276, 32
  %v704 = vpop.permute.xlu0 %703
  %705 = vrot.lane.b32.xlu0 %v279, 32
  %v706 = vpop.permute.xlu0 %705
  %707 = vrot.lane.b32.xlu0 %v282, 32
  %v708 = vpop.permute.xlu0 %707
  %709 = vrot.lane.b32.xlu0 %v678, 32
  %v710 = vpop.permute.xlu0 %709
  %vm727 = vcmask 31744
  %v728 = vsel %vm727, %v36, %v155
  %v729 = vsel %vm727, %v38, %v157
  %v730 = vsel %vm727, %v40, %v159
  %v731 = vsel %vm727, %v42, %v161
  %v732 = vsel %vm727, %v44, %v163
  %v733 = vsel %vm727, %v46, %v165
  %v734 = vsel %vm727, %v48, %v167
  %v735 = vsel %vm727, %v50, %v169
  %v736 = vsel %vm727, %v54, %v171
  %v737 = vsel %vm727, %v56, %v173
  %v738 = vsel %vm727, %v58, %v175
  %v739 = vsel %vm727, %v60, %v177
  %v740 = vsel %vm727, %v62, %v179
  %v741 = vsel %vm727, %v64, %v181
  %v742 = vsel %vm727, %v66, %v183
  %v743 = vsel %vm727, %v68, %v185
  %vm744 = vcmask 64512
  %v745 = vsel %vm744, %v728, %v284
  %v746 = vsel %vm744, %v729, %v286
  %v747 = vsel %vm744, %v730, %v288
  %v748 = vsel %vm744, %v731, %v290
  %v749 = vsel %vm744, %v732, %v292
  %v750 = vsel %vm744, %v733, %v294
  %v751 = vsel %vm744, %v734, %v296
  %v752 = vsel %vm744, %v735, %v298
  %v753 = vsel %vm744, %v736, %v300
  %v754 = vsel %vm744, %v737, %v302
  %v755 = vsel %vm744, %v738, %v304
  %v756 = vsel %vm744, %v739, %v306
  %v757 = vsel %vm744, %v740, %v308
  %v758 = vsel %vm744, %v741, %v310
  %v759 = vsel %vm744, %v742, %v312
  %v760 = vsel %vm744, %v743, %v314
  %vm761 = vcmask 97280
  %v762 = vsel %vm761, %v745, %v348
  %v763 = vsel %vm761, %v746, %v350
  %v764 = vsel %vm761, %v747, %v352
  %v765 = vsel %vm761, %v748, %v354
  %v766 = vsel %vm761, %v749, %v356
  %v767 = vsel %vm761, %v750, %v358
  %v768 = vsel %vm761, %v751, %v360
  %v769 = vsel %vm761, %v752, %v362
  %v770 = vsel %vm761, %v753, %v364
  %v771 = vsel %vm761, %v754, %v366
  %v772 = vsel %vm761, %v755, %v368
  %v773 = vsel %vm761, %v756, %v370
  %v774 = vsel %vm761, %v757, %v372
  %v775 = vsel %vm761, %v758, %v374
  %v776 = vsel %vm761, %v759, %v376
  %v777 = vsel %vm761, %v760, %v378
  %vm778 = vcmask 130048
  %v779 = vsel %vm778, %v762, %v412
  %v780 = vsel %vm778, %v763, %v414
  %v781 = vsel %vm778, %v764, %v416
  %v782 = vsel %vm778, %v765, %v418
  %v783 = vsel %vm778, %v766, %v420
  %v784 = vsel %vm778, %v767, %v422
  %v785 = vsel %vm778, %v768, %v424
  %v786 = vsel %vm778, %v769, %v426
  %v787 = vsel %vm778, %v770, %v428
  %v788 = vsel %vm778, %v771, %v430
  %v789 = vsel %vm778, %v772, %v432
  %v790 = vsel %vm778, %v773, %v434
  %v791 = vsel %vm778, %v774, %v436
  %v792 = vsel %vm778, %v775, %v438
  %v793 = vsel %vm778, %v776, %v440
  %v794 = vsel %vm778, %v777, %v442
  %vm795 = vcmask 162816
  %v796 = vsel %vm795, %v779, %v524
  %v797 = vsel %vm795, %v780, %v526
  %v798 = vsel %vm795, %v781, %v528
  %v799 = vsel %vm795, %v782, %v530
  %v800 = vsel %vm795, %v783, %v532
  %v801 = vsel %vm795, %v784, %v534
  %v802 = vsel %vm795, %v785, %v536
  %v803 = vsel %vm795, %v786, %v538
  %v804 = vsel %vm795, %v787, %v540
  %v805 = vsel %vm795, %v788, %v542
  %v806 = vsel %vm795, %v789, %v544
  %v807 = vsel %vm795, %v790, %v546
  %v808 = vsel %vm795, %v791, %v548
  %v809 = vsel %vm795, %v792, %v550
  %v810 = vsel %vm795, %v793, %v552
  %v811 = vsel %vm795, %v794, %v554
  %vm812 = vcmask 195584
  %v813 = vsel %vm812, %v796, %v574
  %v814 = vsel %vm812, %v797, %v576
  %v815 = vsel %vm812, %v798, %v578
  %v816 = vsel %vm812, %v799, %v580
  %v817 = vsel %vm812, %v800, %v582
  %v818 = vsel %vm812, %v801, %v584
  %v819 = vsel %vm812, %v802, %v586
  %v820 = vsel %vm812, %v803, %v588
  %v821 = vsel %vm812, %v804, %v590
  %v822 = vsel %vm812, %v805, %v592
  %v823 = vsel %vm812, %v806, %v594
  %v824 = vsel %vm812, %v807, %v596
  %v825 = vsel %vm812, %v808, %v598
  %v826 = vsel %vm812, %v809, %v600
  %v827 = vsel %vm812, %v810, %v602
  %v828 = vsel %vm812, %v811, %v604
  %vm829 = vcmask 228352
  %v830 = vsel %vm829, %v813, %v624
  %v831 = vsel %vm829, %v814, %v626
  %v832 = vsel %vm829, %v815, %v628
  %v833 = vsel %vm829, %v816, %v630
  %v834 = vsel %vm829, %v817, %v632
  %v835 = vsel %vm829, %v818, %v634
  %v836 = vsel %vm829, %v819, %v636
  %v837 = vsel %vm829, %v820, %v638
  %v838 = vsel %vm829, %v821, %v640
  %v839 = vsel %vm829, %v822, %v642
  %v840 = vsel %vm829, %v823, %v644
  %v841 = vsel %vm829, %v824, %v646
  %v842 = vsel %vm829, %v825, %v648
  %v843 = vsel %vm829, %v826, %v650
  %v844 = vsel %vm829, %v827, %v652
  %v845 = vsel %vm829, %v828, %v654
  %vm846 = vcmask 261120
  %v847 = vsel %vm846, %v830, %v680
  %v848 = vsel %vm846, %v831, %v682
  %v849 = vsel %vm846, %v832, %v684
  %v850 = vsel %vm846, %v833, %v686
  %v851 = vsel %vm846, %v834, %v688
  %v852 = vsel %vm846, %v835, %v690
  %v853 = vsel %vm846, %v836, %v692
  %v854 = vsel %vm846, %v837, %v694
  %v855 = vsel %vm846, %v838, %v696
  %v856 = vsel %vm846, %v839, %v698
  %v857 = vsel %vm846, %v840, %v700
  %v858 = vsel %vm846, %v841, %v702
  %v859 = vsel %vm846, %v842, %v704
  %v860 = vsel %vm846, %v843, %v706
  %v861 = vsel %vm846, %v844, %v708
  %v862 = vsel %vm846, %v845, %v710
  %v863 = vpack.c.bf16 %v848, %v847
  %v864 = vpack.c.bf16 %v850, %v849
  %v865 = vpack.c.bf16 %v852, %v851
  %v866 = vpack.c.bf16 %v854, %v853
  %v867 = vpack.c.bf16 %v856, %v855
  %v868 = vpack.c.bf16 %v858, %v857
  %v869 = vpack.c.bf16 %v860, %v859
  %v870 = vpack.c.bf16 %v862, %v861
  %v871 = vld [vmem:[%s4] sm:$0xf]
  %v872 = vld [vmem:[%s4 + $0x4] sm:$0xf]
  %v873 = vld [vmem:[%s4 + $0x8] sm:$0xf]
  %v874 = vld [vmem:[%s4 + $0xc] sm:$0xf]
  %v875 = vld [vmem:[%s4 + $0x10] sm:$0x3]
  %v881 = vunpack.c.l.b16 %v871
  %v882 = vunpack.c.l.b16 %v872
  %v883 = vunpack.c.l.b16 %v873
  %v884 = vunpack.c.l.b16 %v874
  %v885 = vunpack.c.l.b16 %v875
  %v886 = vpack.c.b16 %v882, %v881
  %v887 = vpack.c.b16 %v884, %v883
  %v888 = vpack.c.b16 %v885, %v885
  %vm891 = vcmask 293888
  %v893 = vsel %vm891, %v863, 0
  %v896 = vsel %vm891, %v864, 0
  %v899 = vsel %vm891, %v865, 0
  %v902 = vsel %vm891, %v866, 0
  %v905 = vsel %vm891, %v867, 0
  %v908 = vsel %vm891, %v868, 0
  %v911 = vsel %vm891, %v869, 0
  %v914 = vsel %vm891, %v870, 0
  %vm916 = vcmask 1041408
  %v918 = vsel %vm916, %v888, 0
  %920 = vmatprep.subr.bf16.mxu0 0
  %921 = vmatpush1.bf16.msra.mxu0 0
  %922 = vmatprep.subr.bf16.mxu0 0
  %923 = vmatpush1.bf16.msra.mxu0 0
  %924 = vmatprep.subr.bf16.mxu0 0
  %925 = vmatpush1.bf16.msra.mxu0 0
  %926 = vmatprep.subr.bf16.mxu0 0
  %927 = vmatpush1.bf16.msra.mxu0 0
  %928 = vmatprep.subr.bf16.mxu0 0
  %929 = vmatpush1.bf16.msra.mxu0 0
  %930 = vmatprep.subr.bf16.mxu0 0
  %931 = vmatpush1.bf16.msra.mxu0 %v918
  %932 = vmatprep.subr.bf16.mxu0 0
  %933 = vmatpush1.bf16.msra.mxu0 %v887
  %934 = vmatprep.subr.bf16.mxu0 0
  %935 = vmatpush1.bf16.msra.mxu0 %v886
  %936 = vmatprep.subr.bf16.mxu0 0
  %937 = vmatpush2.bf16.msra.mxu0 0
  %938 = vmatprep.subr.bf16.mxu0 0
  %939 = vmatpush2.bf16.msra.mxu0 0
  %940 = vmatprep.subr.bf16.mxu0 0
  %941 = vmatpush2.bf16.msra.mxu0 0
  %942 = vmatprep.subr.bf16.mxu0 0
  %943 = vmatpush2.bf16.msra.mxu0 0
  %944 = vmatprep.subr.bf16.mxu0 0
  %945 = vmatpush2.bf16.msra.mxu0 0
  %946 = vmatprep.subr.bf16.mxu0 0
  %947 = vmatpush2.bf16.msra.mxu0 0
  %948 = vmatprep.subr.bf16.mxu0 0
  %949 = vmatpush2.bf16.msra.mxu0 0
  %950 = vmatprep.subr.bf16.mxu0 0
  %951 = vmatpush2.bf16.msra.mxu0 0
  %952 = vmatprep.mubr.bf16.mxu0 0
  %953 = vmatmul.mubr.bf16.gmra.mxu0 %v893
  %v954 = vpop.f32.mrf.mxu0
  %v955 = vadd.f32 0.0, %v954
  %v956 = vpop.f32.mrf.mxu0
  %v957 = vpop.f32.mrf.mxu0
  %v958 = vadd.f32 0.0, %v957
  %v959 = vpop.f32.mrf.mxu0
  %960 = vmatprep.mubr.bf16.mxu0 0
  %961 = vmatmul.mubr.bf16.gmra.mxu0 %v896
  %v962 = vpop.f32.mrf.mxu0
  %v963 = vadd.f32 0.0, %v962
  %v964 = vpop.f32.mrf.mxu0
  %v965 = vpop.f32.mrf.mxu0
  %v966 = vadd.f32 0.0, %v965
  %v967 = vpop.f32.mrf.mxu0
  %968 = vmatprep.mubr.bf16.mxu0 0
  %969 = vmatmul.mubr.bf16.gmra.mxu0 %v899
  %v970 = vpop.f32.mrf.mxu0
  %v971 = vadd.f32 0.0, %v970
  %v972 = vpop.f32.mrf.mxu0
  %v973 = vpop.f32.mrf.mxu0
  %v974 = vadd.f32 0.0, %v973
  %v975 = vpop.f32.mrf.mxu0
  %976 = vmatprep.mubr.bf16.mxu0 0
  %977 = vmatmul.mubr.bf16.gmra.mxu0 %v902
  %v978 = vpop.f32.mrf.mxu0
  %v979 = vadd.f32 0.0, %v978
  %v980 = vpop.f32.mrf.mxu0
  %v981 = vpop.f32.mrf.mxu0
  %v982 = vadd.f32 0.0, %v981
  %v983 = vpop.f32.mrf.mxu0
  %984 = vmatprep.mubr.bf16.mxu0 0
  %985 = vmatmul.mubr.bf16.gmra.mxu0 %v905
  %v986 = vpop.f32.mrf.mxu0
  %v987 = vadd.f32 0.0, %v986
  %v988 = vpop.f32.mrf.mxu0
  %v989 = vpop.f32.mrf.mxu0
  %v990 = vadd.f32 0.0, %v989
  %v991 = vpop.f32.mrf.mxu0
  %992 = vmatprep.mubr.bf16.mxu0 0
  %993 = vmatmul.mubr.bf16.gmra.mxu0 %v908
  %v994 = vpop.f32.mrf.mxu0
  %v995 = vadd.f32 0.0, %v994
  %v996 = vpop.f32.mrf.mxu0
  %v997 = vpop.f32.mrf.mxu0
  %v998 = vadd.f32 0.0, %v997
  %v999 = vpop.f32.mrf.mxu0
  %1000 = vmatprep.mubr.bf16.mxu0 0
  %1001 = vmatmul.mubr.bf16.gmra.mxu0 %v911
  %v1002 = vpop.f32.mrf.mxu0
  %v1003 = vadd.f32 0.0, %v1002
  %v1004 = vpop.f32.mrf.mxu0
  %v1005 = vpop.f32.mrf.mxu0
  %v1006 = vadd.f32 0.0, %v1005
  %v1007 = vpop.f32.mrf.mxu0
  %1008 = vmatprep.mubr.bf16.mxu0 0
  %1009 = vmatmul.mubr.bf16.gmra.mxu0 %v914
  %v1010 = vpop.f32.mrf.mxu0
  %v1011 = vadd.f32 0.0, %v1010
  %v1012 = vpop.f32.mrf.mxu0
  %v1013 = vpop.f32.mrf.mxu0
  %v1014 = vadd.f32 0.0, %v1013
  %v1015 = vpop.f32.mrf.mxu0
  %1016 = vdwg.mxu0
  %v1017 = vsel %vm778, %v955, 0.0
  %v1018 = vsel %vm778, %v958, 0.0
  %v1019 = vadd.f32 %v1017, %v1018
  %v1020 = vsel %vm778, %v963, 0.0
  %v1021 = vadd.f32 %v1019, %v1020
  %v1022 = vsel %vm778, %v966, 0.0
  %v1023 = vadd.f32 %v1021, %v1022
  %v1024 = vsel %vm778, %v971, 0.0
  %v1025 = vadd.f32 %v1023, %v1024
  %v1026 = vsel %vm778, %v974, 0.0
  %v1027 = vadd.f32 %v1025, %v1026
  %v1028 = vsel %vm778, %v979, 0.0
  %v1029 = vadd.f32 %v1027, %v1028
  %v1030 = vsel %vm778, %v982, 0.0
  %v1031 = vadd.f32 %v1029, %v1030
  %v1032 = vsel %vm778, %v987, 0.0
  %v1033 = vadd.f32 %v1031, %v1032
  %v1034 = vsel %vm778, %v990, 0.0
  %v1035 = vadd.f32 %v1033, %v1034
  %v1036 = vsel %vm778, %v995, 0.0
  %v1037 = vadd.f32 %v1035, %v1036
  %v1038 = vsel %vm778, %v998, 0.0
  %v1039 = vadd.f32 %v1037, %v1038
  %v1040 = vsel %vm778, %v1003, 0.0
  %v1041 = vadd.f32 %v1039, %v1040
  %v1042 = vsel %vm778, %v1006, 0.0
  %v1043 = vadd.f32 %v1041, %v1042
  %v1044 = vsel %vm778, %v1011, 0.0
  %v1045 = vadd.f32 %v1043, %v1044
  %v1046 = vsel %vm778, %v1014, 0.0
  %v1047 = vadd.f32 %v1045, %v1046
  %v1048 = vrot.slane %v1047, 4
  %v1049 = vadd.f32 %v1047, %v1048
  %v1050 = vrot.slane %v1049, 2
  %v1051 = vadd.f32 %v1049, %v1050
  %v1052 = vrot.slane %v1051, 1
  %v1053 = vadd.f32 %v1051, %v1052
  %v1054 = vmul.f32 %v1053, 0.0078125
  %v1055 = vmul.f32 %v955, %v955
  %v1056 = vmul.f32 %v958, %v958
  %v1057 = vmul.f32 %v963, %v963
  %v1058 = vmul.f32 %v966, %v966
  %v1059 = vmul.f32 %v971, %v971
  %v1060 = vmul.f32 %v974, %v974
  %v1061 = vmul.f32 %v979, %v979
  %v1062 = vmul.f32 %v982, %v982
  %v1063 = vmul.f32 %v987, %v987
  %v1064 = vmul.f32 %v990, %v990
  %v1065 = vmul.f32 %v995, %v995
  %v1066 = vmul.f32 %v998, %v998
  %v1067 = vmul.f32 %v1003, %v1003
  %v1068 = vmul.f32 %v1006, %v1006
  %v1069 = vmul.f32 %v1011, %v1011
  %v1070 = vmul.f32 %v1014, %v1014
  %v1071 = vsel %vm778, %v1055, 0.0
  %v1072 = vsel %vm778, %v1056, 0.0
  %v1073 = vadd.f32 %v1071, %v1072
  %v1074 = vsel %vm778, %v1057, 0.0
  %v1075 = vadd.f32 %v1073, %v1074
  %v1076 = vsel %vm778, %v1058, 0.0
  %v1077 = vadd.f32 %v1075, %v1076
  %v1078 = vsel %vm778, %v1059, 0.0
  %v1079 = vadd.f32 %v1077, %v1078
  %v1080 = vsel %vm778, %v1060, 0.0
  %v1081 = vadd.f32 %v1079, %v1080
  %v1082 = vsel %vm778, %v1061, 0.0
  %v1083 = vadd.f32 %v1081, %v1082
  %v1084 = vsel %vm778, %v1062, 0.0
  %v1085 = vadd.f32 %v1083, %v1084
  %v1086 = vsel %vm778, %v1063, 0.0
  %v1087 = vadd.f32 %v1085, %v1086
  %v1088 = vsel %vm778, %v1064, 0.0
  %v1089 = vadd.f32 %v1087, %v1088
  %v1090 = vsel %vm778, %v1065, 0.0
  %v1091 = vadd.f32 %v1089, %v1090
  %v1092 = vsel %vm778, %v1066, 0.0
  %v1093 = vadd.f32 %v1091, %v1092
  %v1094 = vsel %vm778, %v1067, 0.0
  %v1095 = vadd.f32 %v1093, %v1094
  %v1096 = vsel %vm778, %v1068, 0.0
  %v1097 = vadd.f32 %v1095, %v1096
  %v1098 = vsel %vm778, %v1069, 0.0
  %v1099 = vadd.f32 %v1097, %v1098
  %v1100 = vsel %vm778, %v1070, 0.0
  %v1101 = vadd.f32 %v1099, %v1100
  %v1102 = vrot.slane %v1101, 4
  %v1103 = vadd.f32 %v1101, %v1102
  %v1104 = vrot.slane %v1103, 2
  %v1105 = vadd.f32 %v1103, %v1104
  %v1106 = vrot.slane %v1105, 1
  %v1107 = vadd.f32 %v1105, %v1106
  %v1108 = vmul.f32 %v1107, 0.0078125
  %v1109 = vmul.f32 %v1054, %v1054
  %v1110 = vsub.f32 %v1108, %v1109
  %v1111 = vld [vmem:[%s6] sm:$0x1]
  %v1112 = vadd.f32 %v1110, 1e-05
  %v1113 = vrsqrt.pop %v1112
  %v1114 = vmul.f32 %v1111, %v1113
  %v1115 = vld [vmem:[%s7] sm:$0x1]
  %v1116 = vmul.f32 %v1054, %v1114
  %v1117 = vsub.f32 %v1115, %v1116
  %v1119 = vlaneseq
  %v1120 = vshrl.u32 %v1119, 7
  %v1121 = vsub.s32 0, %v1120
  %v1122 = vrot.slane %v1114, %v1121
  %v1124 = vmul.f32 %v955, %v1122
  %v1125 = vmul.f32 %v958, %v1122
  %v1126 = vmul.f32 %v963, %v1122
  %v1127 = vmul.f32 %v966, %v1122
  %v1128 = vmul.f32 %v971, %v1122
  %v1129 = vmul.f32 %v974, %v1122
  %v1130 = vmul.f32 %v979, %v1122
  %v1131 = vmul.f32 %v982, %v1122
  %v1132 = vmul.f32 %v987, %v1122
  %v1133 = vmul.f32 %v990, %v1122
  %v1134 = vmul.f32 %v995, %v1122
  %v1135 = vmul.f32 %v998, %v1122
  %v1136 = vmul.f32 %v1003, %v1122
  %v1137 = vmul.f32 %v1006, %v1122
  %v1138 = vmul.f32 %v1011, %v1122
  %v1139 = vmul.f32 %v1014, %v1122
  %v1141 = vlaneseq
  %v1142 = vshrl.u32 %v1141, 7
  %v1143 = vsub.s32 0, %v1142
  %v1144 = vrot.slane %v1117, %v1143
  %v1146 = vadd.f32 %v1124, %v1144
  %v1147 = vadd.f32 %v1125, %v1144
  %v1148 = vadd.f32 %v1126, %v1144
  %v1149 = vadd.f32 %v1127, %v1144
  %v1150 = vadd.f32 %v1128, %v1144
  %v1151 = vadd.f32 %v1129, %v1144
  %v1152 = vadd.f32 %v1130, %v1144
  %v1153 = vadd.f32 %v1131, %v1144
  %v1154 = vadd.f32 %v1132, %v1144
  %v1155 = vadd.f32 %v1133, %v1144
  %v1156 = vadd.f32 %v1134, %v1144
  %v1157 = vadd.f32 %v1135, %v1144
  %v1158 = vadd.f32 %v1136, %v1144
  %v1159 = vadd.f32 %v1137, %v1144
  %v1160 = vadd.f32 %v1138, %v1144
  %v1161 = vadd.f32 %v1139, %v1144
  %v1162 = vmax.f32 %v1146, 0.0
  %v1163 = vmax.f32 %v1147, 0.0
  %v1164 = vmax.f32 %v1148, 0.0
  %v1165 = vmax.f32 %v1149, 0.0
  %v1166 = vmax.f32 %v1150, 0.0
  %v1167 = vmax.f32 %v1151, 0.0
  %v1168 = vmax.f32 %v1152, 0.0
  %v1169 = vmax.f32 %v1153, 0.0
  %v1170 = vmax.f32 %v1154, 0.0
  %v1171 = vmax.f32 %v1155, 0.0
  %v1172 = vmax.f32 %v1156, 0.0
  %v1173 = vmax.f32 %v1157, 0.0
  %v1174 = vmax.f32 %v1158, 0.0
  %v1175 = vmax.f32 %v1159, 0.0
  %v1176 = vmax.f32 %v1160, 0.0
  %v1177 = vmax.f32 %v1161, 0.0
  %1178 = vst.msk [vmem:[#allocation2] sm:$0xff] %vm744, 0.0
  %vm1179 = vcmask 58368
  %1180 = vst.msk [vmem:[#allocation2 + $0x8] sm:$0x3] %vm1179, 0.0
  %1181 = vst.msk [vmem:[#allocation2 + $0xa0] sm:$0xff] %vm744, 0.0
  %1182 = vst.msk [vmem:[#allocation2 + $0xa8] sm:$0x3] %vm1179, 0.0
  %s1183 = scalar_lea.vmem [#allocation2], 144
  %1184 = vst.msk [vmem:[%s1183] sm:$0xff] %vm744, 0.0
  %1185 = vst.msk [vmem:[%s1183 + $0x8] sm:$0x3] %vm1179, 0.0
  %1186 = vst.msk [vmem:[%s1183 + $0xa0] sm:$0xff] %vm744, 0.0
  %1187 = vst.msk [vmem:[%s1183 + $0xa8] sm:$0x3] %vm1179, 0.0
  %vm1188 = vcmask 57344
  %1189 = vst.msk [vmem:[#allocation2] sm:$0x1] %vm1188, 0.0
  %1190 = vst.msk [vmem:[#allocation2 + $0x10] sm:$0x1] %vm1188, 0.0
  %1191 = vst.msk [vmem:[#allocation2 + $0x20] sm:$0x1] %vm1188, 0.0
  %1192 = vst.msk [vmem:[#allocation2 + $0x30] sm:$0x1] %vm1188, 0.0
  %1193 = vst.msk [vmem:[#allocation2 + $0x40] sm:$0x1] %vm1188, 0.0
  %1194 = vst.msk [vmem:[#allocation2 + $0x50] sm:$0x1] %vm1188, 0.0
  %1195 = vst.msk [vmem:[#allocation2 + $0x60] sm:$0x1] %vm1188, 0.0
  %1196 = vst.msk [vmem:[#allocation2 + $0x70] sm:$0x1] %vm1188, 0.0
  %1197 = vst.msk [vmem:[#allocation2 + $0x80] sm:$0x1] %vm1188, 0.0
  %1198 = vst.msk [vmem:[#allocation2 + $0x90] sm:$0x1] %vm1188, 0.0
  %1199 = vst.msk [vmem:[#allocation2 + $0xa0] sm:$0x1] %vm1188, 0.0
  %1200 = vst.msk [vmem:[#allocation2 + $0xb0] sm:$0x1] %vm1188, 0.0
  %1201 = vst.msk [vmem:[#allocation2 + $0xc0] sm:$0x1] %vm1188, 0.0
  %1202 = vst.msk [vmem:[#allocation2 + $0xd0] sm:$0x1] %vm1188, 0.0
  %1203 = vst.msk [vmem:[#allocation2 + $0xe0] sm:$0x1] %vm1188, 0.0
  %1204 = vst.msk [vmem:[#allocation2 + $0xf0] sm:$0x1] %vm1188, 0.0
  %1205 = vst.msk [vmem:[#allocation2 + $0x100] sm:$0x1] %vm1188, 0.0
  %1206 = vst.msk [vmem:[#allocation2 + $0x110] sm:$0x1] %vm1188, 0.0
  %1207 = vst.msk [vmem:[#allocation2 + $0x120] sm:$0x1] %vm1188, 0.0
  %1208 = vst.msk [vmem:[#allocation2 + $0x130] sm:$0x1] %vm1188, 0.0
  %1209 = vst.msk [vmem:[#allocation2 + $0x9] sm:$0x1] %vm1188, 0.0
  %1210 = vst.msk [vmem:[#allocation2 + $0x19] sm:$0x1] %vm1188, 0.0
  %1211 = vst.msk [vmem:[#allocation2 + $0x29] sm:$0x1] %vm1188, 0.0
  %1212 = vst.msk [vmem:[#allocation2 + $0x39] sm:$0x1] %vm1188, 0.0
  %1213 = vst.msk [vmem:[#allocation2 + $0x49] sm:$0x1] %vm1188, 0.0
  %1214 = vst.msk [vmem:[#allocation2 + $0x59] sm:$0x1] %vm1188, 0.0
  %1215 = vst.msk [vmem:[#allocation2 + $0x69] sm:$0x1] %vm1188, 0.0
  %1216 = vst.msk [vmem:[#allocation2 + $0x79] sm:$0x1] %vm1188, 0.0
  %1217 = vst.msk [vmem:[#allocation2 + $0x89] sm:$0x1] %vm1188, 0.0
  %1218 = vst.msk [vmem:[#allocation2 + $0x99] sm:$0x1] %vm1188, 0.0
  %1219 = vst.msk [vmem:[#allocation2 + $0xa9] sm:$0x1] %vm1188, 0.0
  %1220 = vst.msk [vmem:[#allocation2 + $0xb9] sm:$0x1] %vm1188, 0.0
  %1221 = vst.msk [vmem:[#allocation2 + $0xc9] sm:$0x1] %vm1188, 0.0
  %1222 = vst.msk [vmem:[#allocation2 + $0xd9] sm:$0x1] %vm1188, 0.0
  %1223 = vst.msk [vmem:[#allocation2 + $0xe9] sm:$0x1] %vm1188, 0.0
  %1224 = vst.msk [vmem:[#allocation2 + $0xf9] sm:$0x1] %vm1188, 0.0
  %1225 = vst.msk [vmem:[#allocation2 + $0x109] sm:$0x1] %vm1188, 0.0
  %1226 = vst.msk [vmem:[#allocation2 + $0x119] sm:$0x1] %vm1188, 0.0
  %1227 = vst.msk [vmem:[#allocation2 + $0x129] sm:$0x1] %vm1188, 0.0
  %1228 = vst.msk [vmem:[#allocation2 + $0x139] sm:$0x1] %vm1188, 0.0
  %s1229 = scalar_lea.vmem [#allocation2], 16
  %1230 = vst.msk [vmem:[%s1229 + $0x1] sm:$0xff] %vm744, %v1162
  %1231 = vst.msk [vmem:[%s1229 + $0x11] sm:$0xff] %vm744, %v1163
  %1232 = vst.msk [vmem:[%s1229 + $0x21] sm:$0xff] %vm744, %v1164
  %1233 = vst.msk [vmem:[%s1229 + $0x31] sm:$0xff] %vm744, %v1165
  %1234 = vst.msk [vmem:[%s1229 + $0x41] sm:$0xff] %vm744, %v1166
  %1235 = vst.msk [vmem:[%s1229 + $0x51] sm:$0xff] %vm744, %v1167
  %1236 = vst.msk [vmem:[%s1229 + $0x61] sm:$0xff] %vm744, %v1168
  %1237 = vst.msk [vmem:[%s1229 + $0x71] sm:$0xff] %vm744, %v1169
  %1238 = vst.msk [vmem:[%s1229 + $0xa1] sm:$0xff] %vm744, %v1170
  %1239 = vst.msk [vmem:[%s1229 + $0xb1] sm:$0xff] %vm744, %v1171
  %1240 = vst.msk [vmem:[%s1229 + $0xc1] sm:$0xff] %vm744, %v1172
  %1241 = vst.msk [vmem:[%s1229 + $0xd1] sm:$0xff] %vm744, %v1173
  %1242 = vst.msk [vmem:[%s1229 + $0xe1] sm:$0xff] %vm744, %v1174
  %1243 = vst.msk [vmem:[%s1229 + $0xf1] sm:$0xff] %vm744, %v1175
  %1244 = vst.msk [vmem:[%s1229 + $0x101] sm:$0xff] %vm744, %v1176
  %1245 = vst.msk [vmem:[%s1229 + $0x111] sm:$0xff] %vm744, %v1177
  %v1246 = vld [vmem:[#allocation2] sm:$0xff]
  %v1247 = vld [vmem:[#allocation2 + $0x8] sm:$0x3]
  %v1248 = vld [vmem:[#allocation2 + $0x10] sm:$0xff]
  %v1249 = vld [vmem:[#allocation2 + $0x18] sm:$0x3]
  %v1250 = vld [vmem:[#allocation2 + $0x20] sm:$0xff]
  %v1251 = vld [vmem:[#allocation2 + $0x28] sm:$0x3]
  %v1252 = vld [vmem:[#allocation2 + $0x30] sm:$0xff]
  %v1253 = vld [vmem:[#allocation2 + $0x38] sm:$0x3]
  %v1254 = vld [vmem:[#allocation2 + $0x40] sm:$0xff]
  %v1255 = vld [vmem:[#allocation2 + $0x48] sm:$0x3]
  %v1256 = vld [vmem:[#allocation2 + $0x50] sm:$0xff]
  %v1257 = vld [vmem:[#allocation2 + $0x58] sm:$0x3]
  %v1258 = vld [vmem:[#allocation2 + $0x60] sm:$0xff]
  %v1259 = vld [vmem:[#allocation2 + $0x68] sm:$0x3]
  %v1260 = vld [vmem:[#allocation2 + $0x70] sm:$0xff]
  %v1261 = vld [vmem:[#allocation2 + $0x78] sm:$0x3]
  %v1262 = vld [vmem:[#allocation2 + $0x80] sm:$0xff]
  %v1263 = vld [vmem:[#allocation2 + $0x88] sm:$0x3]
  %v1264 = vld [vmem:[#allocation2 + $0x90] sm:$0xff]
  %v1265 = vld [vmem:[#allocation2 + $0x98] sm:$0x3]
  %v1266 = vld [vmem:[#allocation2 + $0xa0] sm:$0xff]
  %v1267 = vld [vmem:[#allocation2 + $0xa8] sm:$0x3]
  %v1268 = vld [vmem:[#allocation2 + $0xb0] sm:$0xff]
  %v1269 = vld [vmem:[#allocation2 + $0xb8] sm:$0x3]
  %v1270 = vld [vmem:[#allocation2 + $0xc0] sm:$0xff]
  %v1271 = vld [vmem:[#allocation2 + $0xc8] sm:$0x3]
  %v1272 = vld [vmem:[#allocation2 + $0xd0] sm:$0xff]
  %v1273 = vld [vmem:[#allocation2 + $0xd8] sm:$0x3]
  %v1274 = vld [vmem:[#allocation2 + $0xe0] sm:$0xff]
  %v1275 = vld [vmem:[#allocation2 + $0xe8] sm:$0x3]
  %v1276 = vld [vmem:[#allocation2 + $0xf0] sm:$0xff]
  %v1277 = vld [vmem:[#allocation2 + $0xf8] sm:$0x3]
  %v1278 = vld [vmem:[#allocation2 + $0x100] sm:$0xff]
  %v1279 = vld [vmem:[#allocation2 + $0x108] sm:$0x3]
  %v1280 = vld [vmem:[#allocation2 + $0x110] sm:$0xff]
  %v1281 = vld [vmem:[#allocation2 + $0x118] sm:$0x3]
  %v1282 = vld [vmem:[#allocation2 + $0x120] sm:$0xff]
  %v1283 = vld [vmem:[#allocation2 + $0x128] sm:$0x3]
  %v1284 = vld [vmem:[#allocation2 + $0x130] sm:$0xff]
  %v1285 = vld [vmem:[#allocation2 + $0x138] sm:$0x3]
  %v1318 = vrot.slane %v1246, 1
  %v1319 = vrot.slane %v1247, 1
  %v1320 = vsel %vm234, %v1318, %v1319
  %v1321 = vrot.slane %v1248, 1
  %v1322 = vrot.slane %v1249, 1
  %v1323 = vsel %vm234, %v1321, %v1322
  %v1324 = vrot.slane %v1250, 1
  %v1325 = vrot.slane %v1251, 1
  %v1326 = vsel %vm234, %v1324, %v1325
  %v1327 = vrot.slane %v1252, 1
  %v1328 = vrot.slane %v1253, 1
  %v1329 = vsel %vm234, %v1327, %v1328
  %v1330 = vrot.slane %v1254, 1
  %v1331 = vrot.slane %v1255, 1
  %v1332 = vsel %vm234, %v1330, %v1331
  %v1333 = vrot.slane %v1256, 1
  %v1334 = vrot.slane %v1257, 1
  %v1335 = vsel %vm234, %v1333, %v1334
  %v1336 = vrot.slane %v1258, 1
  %v1337 = vrot.slane %v1259, 1
  %v1338 = vsel %vm234, %v1336, %v1337
  %v1339 = vrot.slane %v1260, 1
  %v1340 = vrot.slane %v1261, 1
  %v1341 = vsel %vm234, %v1339, %v1340
  %v1342 = vrot.slane %v1266, 1
  %v1343 = vrot.slane %v1267, 1
  %v1344 = vsel %vm234, %v1342, %v1343
  %v1345 = vrot.slane %v1268, 1
  %v1346 = vrot.slane %v1269, 1
  %v1347 = vsel %vm234, %v1345, %v1346
  %v1348 = vrot.slane %v1270, 1
  %v1349 = vrot.slane %v1271, 1
  %v1350 = vsel %vm234, %v1348, %v1349
  %v1351 = vrot.slane %v1272, 1
  %v1352 = vrot.slane %v1273, 1
  %v1353 = vsel %vm234, %v1351, %v1352
  %v1354 = vrot.slane %v1274, 1
  %v1355 = vrot.slane %v1275, 1
  %v1356 = vsel %vm234, %v1354, %v1355
  %v1357 = vrot.slane %v1276, 1
  %v1358 = vrot.slane %v1277, 1
  %v1359 = vsel %vm234, %v1357, %v1358
  %v1360 = vrot.slane %v1278, 1
  %v1361 = vrot.slane %v1279, 1
  %v1362 = vsel %vm234, %v1360, %v1361
  %v1363 = vrot.slane %v1280, 1
  %v1364 = vrot.slane %v1281, 1
  %v1365 = vsel %vm234, %v1363, %v1364
  %1366 = vrot.lane.b32.xlu0 %v1320, 8
  %v1367 = vpop.permute.xlu0 %1366
  %1368 = vrot.lane.b32.xlu0 %v1323, 8
  %v1369 = vpop.permute.xlu0 %1368
  %1370 = vrot.lane.b32.xlu0 %v1326, 8
  %v1371 = vpop.permute.xlu0 %1370
  %1372 = vrot.lane.b32.xlu0 %v1329, 8
  %v1373 = vpop.permute.xlu0 %1372
  %1374 = vrot.lane.b32.xlu0 %v1332, 8
  %v1375 = vpop.permute.xlu0 %1374
  %1376 = vrot.lane.b32.xlu0 %v1335, 8
  %v1377 = vpop.permute.xlu0 %1376
  %1378 = vrot.lane.b32.xlu0 %v1338, 8
  %v1379 = vpop.permute.xlu0 %1378
  %1380 = vrot.lane.b32.xlu0 %v1341, 8
  %v1381 = vpop.permute.xlu0 %1380
  %1382 = vrot.lane.b32.xlu0 %v1344, 8
  %v1383 = vpop.permute.xlu0 %1382
  %1384 = vrot.lane.b32.xlu0 %v1347, 8
  %v1385 = vpop.permute.xlu0 %1384
  %1386 = vrot.lane.b32.xlu0 %v1350, 8
  %v1387 = vpop.permute.xlu0 %1386
  %1388 = vrot.lane.b32.xlu0 %v1353, 8
  %v1389 = vpop.permute.xlu0 %1388
  %1390 = vrot.lane.b32.xlu0 %v1356, 8
  %v1391 = vpop.permute.xlu0 %1390
  %1392 = vrot.lane.b32.xlu0 %v1359, 8
  %v1393 = vpop.permute.xlu0 %1392
  %1394 = vrot.lane.b32.xlu0 %v1362, 8
  %v1395 = vpop.permute.xlu0 %1394
  %1396 = vrot.lane.b32.xlu0 %v1365, 8
  %v1397 = vpop.permute.xlu0 %1396
  %vm1414 = vcmask 1045504
  %v1415 = vrot.slane %v1246, 2
  %v1416 = vrot.slane %v1247, 2
  %v1417 = vsel %vm1414, %v1415, %v1416
  %v1418 = vrot.slane %v1248, 2
  %v1419 = vrot.slane %v1249, 2
  %v1420 = vsel %vm1414, %v1418, %v1419
  %v1421 = vrot.slane %v1250, 2
  %v1422 = vrot.slane %v1251, 2
  %v1423 = vsel %vm1414, %v1421, %v1422
  %v1424 = vrot.slane %v1252, 2
  %v1425 = vrot.slane %v1253, 2
  %v1426 = vsel %vm1414, %v1424, %v1425
  %v1427 = vrot.slane %v1254, 2
  %v1428 = vrot.slane %v1255, 2
  %v1429 = vsel %vm1414, %v1427, %v1428
  %v1430 = vrot.slane %v1256, 2
  %v1431 = vrot.slane %v1257, 2
  %v1432 = vsel %vm1414, %v1430, %v1431
  %v1433 = vrot.slane %v1258, 2
  %v1434 = vrot.slane %v1259, 2
  %v1435 = vsel %vm1414, %v1433, %v1434
  %v1436 = vrot.slane %v1260, 2
  %v1437 = vrot.slane %v1261, 2
  %v1438 = vsel %vm1414, %v1436, %v1437
  %v1439 = vrot.slane %v1266, 2
  %v1440 = vrot.slane %v1267, 2
  %v1441 = vsel %vm1414, %v1439, %v1440
  %v1442 = vrot.slane %v1268, 2
  %v1443 = vrot.slane %v1269, 2
  %v1444 = vsel %vm1414, %v1442, %v1443
  %v1445 = vrot.slane %v1270, 2
  %v1446 = vrot.slane %v1271, 2
  %v1447 = vsel %vm1414, %v1445, %v1446
  %v1448 = vrot.slane %v1272, 2
  %v1449 = vrot.slane %v1273, 2
  %v1450 = vsel %vm1414, %v1448, %v1449
  %v1451 = vrot.slane %v1274, 2
  %v1452 = vrot.slane %v1275, 2
  %v1453 = vsel %vm1414, %v1451, %v1452
  %v1454 = vrot.slane %v1276, 2
  %v1455 = vrot.slane %v1277, 2
  %v1456 = vsel %vm1414, %v1454, %v1455
  %v1457 = vrot.slane %v1278, 2
  %v1458 = vrot.slane %v1279, 2
  %v1459 = vsel %vm1414, %v1457, %v1458
  %v1460 = vrot.slane %v1280, 2
  %v1461 = vrot.slane %v1281, 2
  %v1462 = vsel %vm1414, %v1460, %v1461
  %1463 = vrot.lane.b32.xlu0 %v1417, 16
  %v1464 = vpop.permute.xlu0 %1463
  %1465 = vrot.lane.b32.xlu0 %v1420, 16
  %v1466 = vpop.permute.xlu0 %1465
  %1467 = vrot.lane.b32.xlu0 %v1423, 16
  %v1468 = vpop.permute.xlu0 %1467
  %1469 = vrot.lane.b32.xlu0 %v1426, 16
  %v1470 = vpop.permute.xlu0 %1469
  %1471 = vrot.lane.b32.xlu0 %v1429, 16
  %v1472 = vpop.permute.xlu0 %1471
  %1473 = vrot.lane.b32.xlu0 %v1432, 16
  %v1474 = vpop.permute.xlu0 %1473
  %1475 = vrot.lane.b32.xlu0 %v1435, 16
  %v1476 = vpop.permute.xlu0 %1475
  %1477 = vrot.lane.b32.xlu0 %v1438, 16
  %v1478 = vpop.permute.xlu0 %1477
  %1479 = vrot.lane.b32.xlu0 %v1441, 16
  %v1480 = vpop.permute.xlu0 %1479
  %1481 = vrot.lane.b32.xlu0 %v1444, 16
  %v1482 = vpop.permute.xlu0 %1481
  %1483 = vrot.lane.b32.xlu0 %v1447, 16
  %v1484 = vpop.permute.xlu0 %1483
  %1485 = vrot.lane.b32.xlu0 %v1450, 16
  %v1486 = vpop.permute.xlu0 %1485
  %1487 = vrot.lane.b32.xlu0 %v1453, 16
  %v1488 = vpop.permute.xlu0 %1487
  %1489 = vrot.lane.b32.xlu0 %v1456, 16
  %v1490 = vpop.permute.xlu0 %1489
  %1491 = vrot.lane.b32.xlu0 %v1459, 16
  %v1492 = vpop.permute.xlu0 %1491
  %1493 = vrot.lane.b32.xlu0 %v1462, 16
  %v1494 = vpop.permute.xlu0 %1493
  %1513 = vrot.lane.b32.xlu0 %v1248, 24
  %v1514 = vpop.permute.xlu0 %1513
  %1515 = vrot.lane.b32.xlu0 %v1250, 24
  %v1516 = vpop.permute.xlu0 %1515
  %1517 = vrot.lane.b32.xlu0 %v1252, 24
  %v1518 = vpop.permute.xlu0 %1517
  %1519 = vrot.lane.b32.xlu0 %v1254, 24
  %v1520 = vpop.permute.xlu0 %1519
  %1521 = vrot.lane.b32.xlu0 %v1256, 24
  %v1522 = vpop.permute.xlu0 %1521
  %1523 = vrot.lane.b32.xlu0 %v1258, 24
  %v1524 = vpop.permute.xlu0 %1523
  %1525 = vrot.lane.b32.xlu0 %v1260, 24
  %v1526 = vpop.permute.xlu0 %1525
  %1527 = vrot.lane.b32.xlu0 %v1262, 24
  %v1528 = vpop.permute.xlu0 %1527
  %1529 = vrot.lane.b32.xlu0 %v1268, 24
  %v1530 = vpop.permute.xlu0 %1529
  %1531 = vrot.lane.b32.xlu0 %v1270, 24
  %v1532 = vpop.permute.xlu0 %1531
  %1533 = vrot.lane.b32.xlu0 %v1272, 24
  %v1534 = vpop.permute.xlu0 %1533
  %1535 = vrot.lane.b32.xlu0 %v1274, 24
  %v1536 = vpop.permute.xlu0 %1535
  %1537 = vrot.lane.b32.xlu0 %v1276, 24
  %v1538 = vpop.permute.xlu0 %1537
  %1539 = vrot.lane.b32.xlu0 %v1278, 24
  %v1540 = vpop.permute.xlu0 %1539
  %1541 = vrot.lane.b32.xlu0 %v1280, 24
  %v1542 = vpop.permute.xlu0 %1541
  %1543 = vrot.lane.b32.xlu0 %v1282, 24
  %v1544 = vpop.permute.xlu0 %1543
  %v1563 = vrot.slane %v1262, 1
  %v1564 = vrot.slane %v1263, 1
  %v1565 = vsel %vm234, %v1563, %v1564
  %v1566 = vrot.slane %v1282, 1
  %v1567 = vrot.slane %v1283, 1
  %v1568 = vsel %vm234, %v1566, %v1567
  %1569 = vrot.lane.b32.xlu0 %v1323, 32
  %v1570 = vpop.permute.xlu0 %1569
  %1571 = vrot.lane.b32.xlu0 %v1326, 32
  %v1572 = vpop.permute.xlu0 %1571
  %1573 = vrot.lane.b32.xlu0 %v1329, 32
  %v1574 = vpop.permute.xlu0 %1573
  %1575 = vrot.lane.b32.xlu0 %v1332, 32
  %v1576 = vpop.permute.xlu0 %1575
  %1577 = vrot.lane.b32.xlu0 %v1335, 32
  %v1578 = vpop.permute.xlu0 %1577
  %1579 = vrot.lane.b32.xlu0 %v1338, 32
  %v1580 = vpop.permute.xlu0 %1579
  %1581 = vrot.lane.b32.xlu0 %v1341, 32
  %v1582 = vpop.permute.xlu0 %1581
  %1583 = vrot.lane.b32.xlu0 %v1565, 32
  %v1584 = vpop.permute.xlu0 %1583
  %1585 = vrot.lane.b32.xlu0 %v1347, 32
  %v1586 = vpop.permute.xlu0 %1585
  %1587 = vrot.lane.b32.xlu0 %v1350, 32
  %v1588 = vpop.permute.xlu0 %1587
  %1589 = vrot.lane.b32.xlu0 %v1353, 32
  %v1590 = vpop.permute.xlu0 %1589
  %1591 = vrot.lane.b32.xlu0 %v1356, 32
  %v1592 = vpop.permute.xlu0 %1591
  %1593 = vrot.lane.b32.xlu0 %v1359, 32
  %v1594 = vpop.permute.xlu0 %1593
  %1595 = vrot.lane.b32.xlu0 %v1362, 32
  %v1596 = vpop.permute.xlu0 %1595
  %1597 = vrot.lane.b32.xlu0 %v1365, 32
  %v1598 = vpop.permute.xlu0 %1597
  %1599 = vrot.lane.b32.xlu0 %v1568, 32
  %v1600 = vpop.permute.xlu0 %1599
  %v1617 = vrot.slane %v1262, 2
  %v1618 = vrot.slane %v1263, 2
  %v1619 = vsel %vm1414, %v1617, %v1618
  %v1620 = vrot.slane %v1282, 2
  %v1621 = vrot.slane %v1283, 2
  %v1622 = vsel %vm1414, %v1620, %v1621
  %1623 = vrot.lane.b32.xlu0 %v1420, 40
  %v1624 = vpop.permute.xlu0 %1623
  %1625 = vrot.lane.b32.xlu0 %v1423, 40
  %v1626 = vpop.permute.xlu0 %1625
  %1627 = vrot.lane.b32.xlu0 %v1426, 40
  %v1628 = vpop.permute.xlu0 %1627
  %1629 = vrot.lane.b32.xlu0 %v1429, 40
  %v1630 = vpop.permute.xlu0 %1629
  %1631 = vrot.lane.b32.xlu0 %v1432, 40
  %v1632 = vpop.permute.xlu0 %1631
  %1633 = vrot.lane.b32.xlu0 %v1435, 40
  %v1634 = vpop.permute.xlu0 %1633
  %1635 = vrot.lane.b32.xlu0 %v1438, 40
  %v1636 = vpop.permute.xlu0 %1635
  %1637 = vrot.lane.b32.xlu0 %v1619, 40
  %v1638 = vpop.permute.xlu0 %1637
  %1639 = vrot.lane.b32.xlu0 %v1444, 40
  %v1640 = vpop.permute.xlu0 %1639
  %1641 = vrot.lane.b32.xlu0 %v1447, 40
  %v1642 = vpop.permute.xlu0 %1641
  %1643 = vrot.lane.b32.xlu0 %v1450, 40
  %v1644 = vpop.permute.xlu0 %1643
  %1645 = vrot.lane.b32.xlu0 %v1453, 40
  %v1646 = vpop.permute.xlu0 %1645
  %1647 = vrot.lane.b32.xlu0 %v1456, 40
  %v1648 = vpop.permute.xlu0 %1647
  %1649 = vrot.lane.b32.xlu0 %v1459, 40
  %v1650 = vpop.permute.xlu0 %1649
  %1651 = vrot.lane.b32.xlu0 %v1462, 40
  %v1652 = vpop.permute.xlu0 %1651
  %1653 = vrot.lane.b32.xlu0 %v1622, 40
  %v1654 = vpop.permute.xlu0 %1653
  %1673 = vrot.lane.b32.xlu0 %v1250, 48
  %v1674 = vpop.permute.xlu0 %1673
  %1675 = vrot.lane.b32.xlu0 %v1252, 48
  %v1676 = vpop.permute.xlu0 %1675
  %1677 = vrot.lane.b32.xlu0 %v1254, 48
  %v1678 = vpop.permute.xlu0 %1677
  %1679 = vrot.lane.b32.xlu0 %v1256, 48
  %v1680 = vpop.permute.xlu0 %1679
  %1681 = vrot.lane.b32.xlu0 %v1258, 48
  %v1682 = vpop.permute.xlu0 %1681
  %1683 = vrot.lane.b32.xlu0 %v1260, 48
  %v1684 = vpop.permute.xlu0 %1683
  %1685 = vrot.lane.b32.xlu0 %v1262, 48
  %v1686 = vpop.permute.xlu0 %1685
  %1687 = vrot.lane.b32.xlu0 %v1264, 48
  %v1688 = vpop.permute.xlu0 %1687
  %1689 = vrot.lane.b32.xlu0 %v1270, 48
  %v1690 = vpop.permute.xlu0 %1689
  %1691 = vrot.lane.b32.xlu0 %v1272, 48
  %v1692 = vpop.permute.xlu0 %1691
  %1693 = vrot.lane.b32.xlu0 %v1274, 48
  %v1694 = vpop.permute.xlu0 %1693
  %1695 = vrot.lane.b32.xlu0 %v1276, 48
  %v1696 = vpop.permute.xlu0 %1695
  %1697 = vrot.lane.b32.xlu0 %v1278, 48
  %v1698 = vpop.permute.xlu0 %1697
  %1699 = vrot.lane.b32.xlu0 %v1280, 48
  %v1700 = vpop.permute.xlu0 %1699
  %1701 = vrot.lane.b32.xlu0 %v1282, 48
  %v1702 = vpop.permute.xlu0 %1701
  %1703 = vrot.lane.b32.xlu0 %v1284, 48
  %v1704 = vpop.permute.xlu0 %1703
  %v1723 = vrot.slane %v1264, 1
  %v1724 = vrot.slane %v1265, 1
  %v1725 = vsel %vm234, %v1723, %v1724
  %v1726 = vrot.slane %v1284, 1
  %v1727 = vrot.slane %v1285, 1
  %v1728 = vsel %vm234, %v1726, %v1727
  %1729 = vrot.lane.b32.xlu0 %v1326, 56
  %v1730 = vpop.permute.xlu0 %1729
  %1731 = vrot.lane.b32.xlu0 %v1329, 56
  %v1732 = vpop.permute.xlu0 %1731
  %1733 = vrot.lane.b32.xlu0 %v1332, 56
  %v1734 = vpop.permute.xlu0 %1733
  %1735 = vrot.lane.b32.xlu0 %v1335, 56
  %v1736 = vpop.permute.xlu0 %1735
  %1737 = vrot.lane.b32.xlu0 %v1338, 56
  %v1738 = vpop.permute.xlu0 %1737
  %1739 = vrot.lane.b32.xlu0 %v1341, 56
  %v1740 = vpop.permute.xlu0 %1739
  %1741 = vrot.lane.b32.xlu0 %v1565, 56
  %v1742 = vpop.permute.xlu0 %1741
  %1743 = vrot.lane.b32.xlu0 %v1725, 56
  %v1744 = vpop.permute.xlu0 %1743
  %1745 = vrot.lane.b32.xlu0 %v1350, 56
  %v1746 = vpop.permute.xlu0 %1745
  %1747 = vrot.lane.b32.xlu0 %v1353, 56
  %v1748 = vpop.permute.xlu0 %1747
  %1749 = vrot.lane.b32.xlu0 %v1356, 56
  %v1750 = vpop.permute.xlu0 %1749
  %1751 = vrot.lane.b32.xlu0 %v1359, 56
  %v1752 = vpop.permute.xlu0 %1751
  %1753 = vrot.lane.b32.xlu0 %v1362, 56
  %v1754 = vpop.permute.xlu0 %1753
  %1755 = vrot.lane.b32.xlu0 %v1365, 56
  %v1756 = vpop.permute.xlu0 %1755
  %1757 = vrot.lane.b32.xlu0 %v1568, 56
  %v1758 = vpop.permute.xlu0 %1757
  %1759 = vrot.lane.b32.xlu0 %v1728, 56
  %v1760 = vpop.permute.xlu0 %1759
  %v1777 = vrot.slane %v1264, 2
  %v1778 = vrot.slane %v1265, 2
  %v1779 = vsel %vm1414, %v1777, %v1778
  %v1780 = vrot.slane %v1284, 2
  %v1781 = vrot.slane %v1285, 2
  %v1782 = vsel %vm1414, %v1780, %v1781
  %1783 = vrot.lane.b32.xlu0 %v1423, 64
  %v1784 = vpop.permute.xlu0 %1783
  %1785 = vrot.lane.b32.xlu0 %v1426, 64
  %v1786 = vpop.permute.xlu0 %1785
  %1787 = vrot.lane.b32.xlu0 %v1429, 64
  %v1788 = vpop.permute.xlu0 %1787
  %1789 = vrot.lane.b32.xlu0 %v1432, 64
  %v1790 = vpop.permute.xlu0 %1789
  %1791 = vrot.lane.b32.xlu0 %v1435, 64
  %v1792 = vpop.permute.xlu0 %1791
  %1793 = vrot.lane.b32.xlu0 %v1438, 64
  %v1794 = vpop.permute.xlu0 %1793
  %1795 = vrot.lane.b32.xlu0 %v1619, 64
  %v1796 = vpop.permute.xlu0 %1795
  %1797 = vrot.lane.b32.xlu0 %v1779, 64
  %v1798 = vpop.permute.xlu0 %1797
  %1799 = vrot.lane.b32.xlu0 %v1447, 64
  %v1800 = vpop.permute.xlu0 %1799
  %1801 = vrot.lane.b32.xlu0 %v1450, 64
  %v1802 = vpop.permute.xlu0 %1801
  %1803 = vrot.lane.b32.xlu0 %v1453, 64
  %v1804 = vpop.permute.xlu0 %1803
  %1805 = vrot.lane.b32.xlu0 %v1456, 64
  %v1806 = vpop.permute.xlu0 %1805
  %1807 = vrot.lane.b32.xlu0 %v1459, 64
  %v1808 = vpop.permute.xlu0 %1807
  %1809 = vrot.lane.b32.xlu0 %v1462, 64
  %v1810 = vpop.permute.xlu0 %1809
  %1811 = vrot.lane.b32.xlu0 %v1622, 64
  %v1812 = vpop.permute.xlu0 %1811
  %1813 = vrot.lane.b32.xlu0 %v1782, 64
  %v1814 = vpop.permute.xlu0 %1813
  %v1831 = vsel %vm744, %v1246, %v1367
  %v1832 = vsel %vm744, %v1248, %v1369
  %v1833 = vsel %vm744, %v1250, %v1371
  %v1834 = vsel %vm744, %v1252, %v1373
  %v1835 = vsel %vm744, %v1254, %v1375
  %v1836 = vsel %vm744, %v1256, %v1377
  %v1837 = vsel %vm744, %v1258, %v1379
  %v1838 = vsel %vm744, %v1260, %v1381
  %v1839 = vsel %vm744, %v1266, %v1383
  %v1840 = vsel %vm744, %v1268, %v1385
  %v1841 = vsel %vm744, %v1270, %v1387
  %v1842 = vsel %vm744, %v1272, %v1389
  %v1843 = vsel %vm744, %v1274, %v1391
  %v1844 = vsel %vm744, %v1276, %v1393
  %v1845 = vsel %vm744, %v1278, %v1395
  %v1846 = vsel %vm744, %v1280, %v1397
  %v1847 = vsel %vm778, %v1831, %v1464
  %v1848 = vsel %vm778, %v1832, %v1466
  %v1849 = vsel %vm778, %v1833, %v1468
  %v1850 = vsel %vm778, %v1834, %v1470
  %v1851 = vsel %vm778, %v1835, %v1472
  %v1852 = vsel %vm778, %v1836, %v1474
  %v1853 = vsel %vm778, %v1837, %v1476
  %v1854 = vsel %vm778, %v1838, %v1478
  %v1855 = vsel %vm778, %v1839, %v1480
  %v1856 = vsel %vm778, %v1840, %v1482
  %v1857 = vsel %vm778, %v1841, %v1484
  %v1858 = vsel %vm778, %v1842, %v1486
  %v1859 = vsel %vm778, %v1843, %v1488
  %v1860 = vsel %vm778, %v1844, %v1490
  %v1861 = vsel %vm778, %v1845, %v1492
  %v1862 = vsel %vm778, %v1846, %v1494
  %v1863 = vsel %vm812, %v1847, %v1514
  %v1864 = vsel %vm812, %v1848, %v1516
  %v1865 = vsel %vm812, %v1849, %v1518
  %v1866 = vsel %vm812, %v1850, %v1520
  %v1867 = vsel %vm812, %v1851, %v1522
  %v1868 = vsel %vm812, %v1852, %v1524
  %v1869 = vsel %vm812, %v1853, %v1526
  %v1870 = vsel %vm812, %v1854, %v1528
  %v1871 = vsel %vm812, %v1855, %v1530
  %v1872 = vsel %vm812, %v1856, %v1532
  %v1873 = vsel %vm812, %v1857, %v1534
  %v1874 = vsel %vm812, %v1858, %v1536
  %v1875 = vsel %vm812, %v1859, %v1538
  %v1876 = vsel %vm812, %v1860, %v1540
  %v1877 = vsel %vm812, %v1861, %v1542
  %v1878 = vsel %vm812, %v1862, %v1544
  %v1879 = vsel %vm846, %v1863, %v1570
  %v1880 = vsel %vm846, %v1864, %v1572
  %v1881 = vsel %vm846, %v1865, %v1574
  %v1882 = vsel %vm846, %v1866, %v1576
  %v1883 = vsel %vm846, %v1867, %v1578
  %v1884 = vsel %vm846, %v1868, %v1580
  %v1885 = vsel %vm846, %v1869, %v1582
  %v1886 = vsel %vm846, %v1870, %v1584
  %v1887 = vsel %vm846, %v1871, %v1586
  %v1888 = vsel %vm846, %v1872, %v1588
  %v1889 = vsel %vm846, %v1873, %v1590
  %v1890 = vsel %vm846, %v1874, %v1592
  %v1891 = vsel %vm846, %v1875, %v1594
  %v1892 = vsel %vm846, %v1876, %v1596
  %v1893 = vsel %vm846, %v1877, %v1598
  %v1894 = vsel %vm846, %v1878, %v1600
  %vm1895 = vcmask 326656
  %v1896 = vsel %vm1895, %v1879, %v1624
  %v1897 = vsel %vm1895, %v1880, %v1626
  %v1898 = vsel %vm1895, %v1881, %v1628
  %v1899 = vsel %vm1895, %v1882, %v1630
  %v1900 = vsel %vm1895, %v1883, %v1632
  %v1901 = vsel %vm1895, %v1884, %v1634
  %v1902 = vsel %vm1895, %v1885, %v1636
  %v1903 = vsel %vm1895, %v1886, %v1638
  %v1904 = vsel %vm1895, %v1887, %v1640
  %v1905 = vsel %vm1895, %v1888, %v1642
  %v1906 = vsel %vm1895, %v1889, %v1644
  %v1907 = vsel %vm1895, %v1890, %v1646
  %v1908 = vsel %vm1895, %v1891, %v1648
  %v1909 = vsel %vm1895, %v1892, %v1650
  %v1910 = vsel %vm1895, %v1893, %v1652
  %v1911 = vsel %vm1895, %v1894, %v1654
  %vm1912 = vcmask 392192
  %v1913 = vsel %vm1912, %v1896, %v1674
  %v1914 = vsel %vm1912, %v1897, %v1676
  %v1915 = vsel %vm1912, %v1898, %v1678
  %v1916 = vsel %vm1912, %v1899, %v1680
  %v1917 = vsel %vm1912, %v1900, %v1682
  %v1918 = vsel %vm1912, %v1901, %v1684
  %v1919 = vsel %vm1912, %v1902, %v1686
  %v1920 = vsel %vm1912, %v1903, %v1688
  %v1921 = vsel %vm1912, %v1904, %v1690
  %v1922 = vsel %vm1912, %v1905, %v1692
  %v1923 = vsel %vm1912, %v1906, %v1694
  %v1924 = vsel %vm1912, %v1907, %v1696
  %v1925 = vsel %vm1912, %v1908, %v1698
  %v1926 = vsel %vm1912, %v1909, %v1700
  %v1927 = vsel %vm1912, %v1910, %v1702
  %v1928 = vsel %vm1912, %v1911, %v1704
  %vm1929 = vcmask 457728
  %v1930 = vsel %vm1929, %v1913, %v1730
  %v1931 = vsel %vm1929, %v1914, %v1732
  %v1932 = vsel %vm1929, %v1915, %v1734
  %v1933 = vsel %vm1929, %v1916, %v1736
  %v1934 = vsel %vm1929, %v1917, %v1738
  %v1935 = vsel %vm1929, %v1918, %v1740
  %v1936 = vsel %vm1929, %v1919, %v1742
  %v1937 = vsel %vm1929, %v1920, %v1744
  %v1938 = vsel %vm1929, %v1921, %v1746
  %v1939 = vsel %vm1929, %v1922, %v1748
  %v1940 = vsel %vm1929, %v1923, %v1750
  %v1941 = vsel %vm1929, %v1924, %v1752
  %v1942 = vsel %vm1929, %v1925, %v1754
  %v1943 = vsel %vm1929, %v1926, %v1756
  %v1944 = vsel %vm1929, %v1927, %v1758
  %v1945 = vsel %vm1929, %v1928, %v1760
  %vm1946 = vcmask 523264
  %v1947 = vsel %vm1946, %v1930, %v1784
  %v1948 = vsel %vm1946, %v1931, %v1786
  %v1949 = vsel %vm1946, %v1932, %v1788
  %v1950 = vsel %vm1946, %v1933, %v1790
  %v1951 = vsel %vm1946, %v1934, %v1792
  %v1952 = vsel %vm1946, %v1935, %v1794
  %v1953 = vsel %vm1946, %v1936, %v1796
  %v1954 = vsel %vm1946, %v1937, %v1798
  %v1955 = vsel %vm1946, %v1938, %v1800
  %v1956 = vsel %vm1946, %v1939, %v1802
  %v1957 = vsel %vm1946, %v1940, %v1804
  %v1958 = vsel %vm1946, %v1941, %v1806
  %v1959 = vsel %vm1946, %v1942, %v1808
  %v1960 = vsel %vm1946, %v1943, %v1810
  %v1961 = vsel %vm1946, %v1944, %v1812
  %v1962 = vsel %vm1946, %v1945, %v1814
  %v1963 = vpack.c.bf16 %v1948, %v1947
  %v1964 = vpack.c.bf16 %v1950, %v1949
  %v1965 = vpack.c.bf16 %v1952, %v1951
  %v1966 = vpack.c.bf16 %v1954, %v1953
  %v1967 = vpack.c.bf16 %v1956, %v1955
  %v1968 = vpack.c.bf16 %v1958, %v1957
  %v1969 = vpack.c.bf16 %v1960, %v1959
  %v1970 = vpack.c.bf16 %v1962, %v1961
  %v1971 = vld [vmem:[%s5] sm:$0xf]
  %v1972 = vld [vmem:[%s5 + $0x4] sm:$0xf]
  %v1973 = vld [vmem:[%s5 + $0x8] sm:$0xf]
  %v1974 = vld [vmem:[%s5 + $0xc] sm:$0xf]
  %v1975 = vld [vmem:[%s5 + $0x10] sm:$0xf]
  %v1976 = vld [vmem:[%s5 + $0x14] sm:$0xf]
  %v1977 = vld [vmem:[%s5 + $0x18] sm:$0xf]
  %v1978 = vld [vmem:[%s5 + $0x1c] sm:$0xf]
  %v1979 = vld [vmem:[%s5 + $0x20] sm:$0xf]
  %v1989 = vunpack.c.l.b16 %v1971
  %v1990 = vunpack.c.l.b16 %v1972
  %v1991 = vunpack.c.l.b16 %v1973
  %v1992 = vunpack.c.l.b16 %v1974
  %v1993 = vunpack.c.l.b16 %v1975
  %v1994 = vunpack.c.l.b16 %v1976
  %v1995 = vunpack.c.l.b16 %v1977
  %v1996 = vunpack.c.l.b16 %v1978
  %v1997 = vunpack.c.l.b16 %v1979
  %v1998 = vpack.c.b16 %v1990, %v1989
  %v1999 = vpack.c.b16 %v1992, %v1991
  %v2000 = vpack.c.b16 %v1994, %v1993
  %v2001 = vpack.c.b16 %v1996, %v1995
  %v2002 = vpack.c.b16 %v1997, %v1997
  %vm2007 = vcmask 588800
  %v2009 = vsel %vm2007, %v1963, 0
  %v2012 = vsel %vm2007, %v1964, 0
  %v2015 = vsel %vm2007, %v1965, 0
  %v2018 = vsel %vm2007, %v1966, 0
  %v2021 = vsel %vm2007, %v1967, 0
  %v2024 = vsel %vm2007, %v1968, 0
  %v2027 = vsel %vm2007, %v1969, 0
  %v2030 = vsel %vm2007, %v1970, 0
  %vm2032 = vcmask 1043456
  %v2034 = vsel %vm2032, %v2002, 0
  %2036 = vmatprep.subr.bf16.mxu0 0
  %2037 = vmatpush1.bf16.msra.mxu0 0
  %2038 = vmatprep.subr.bf16.mxu0 0
  %2039 = vmatpush1.bf16.msra.mxu0 0
  %2040 = vmatprep.subr.bf16.mxu0 0
  %2041 = vmatpush1.bf16.msra.mxu0 0
  %2042 = vmatprep.subr.bf16.mxu0 0
  %2043 = vmatpush1.bf16.msra.mxu0 %v2034
  %2044 = vmatprep.subr.bf16.mxu0 0
  %2045 = vmatpush1.bf16.msra.mxu0 %v2001
  %2046 = vmatprep.subr.bf16.mxu0 0
  %2047 = vmatpush1.bf16.msra.mxu0 %v2000
  %2048 = vmatprep.subr.bf16.mxu0 0
  %2049 = vmatpush1.bf16.msra.mxu0 %v1999
  %2050 = vmatprep.subr.bf16.mxu0 0
  %2051 = vmatpush1.bf16.msra.mxu0 %v1998
  %2052 = vmatprep.subr.bf16.mxu0 0
  %2053 = vmatpush2.bf16.msra.mxu0 0
  %2054 = vmatprep.subr.bf16.mxu0 0
  %2055 = vmatpush2.bf16.msra.mxu0 0
  %2056 = vmatprep.subr.bf16.mxu0 0
  %2057 = vmatpush2.bf16.msra.mxu0 0
  %2058 = vmatprep.subr.bf16.mxu0 0
  %2059 = vmatpush2.bf16.msra.mxu0 0
  %2060 = vmatprep.subr.bf16.mxu0 0
  %2061 = vmatpush2.bf16.msra.mxu0 0
  %2062 = vmatprep.subr.bf16.mxu0 0
  %2063 = vmatpush2.bf16.msra.mxu0 0
  %2064 = vmatprep.subr.bf16.mxu0 0
  %2065 = vmatpush2.bf16.msra.mxu0 0
  %2066 = vmatprep.subr.bf16.mxu0 0
  %2067 = vmatpush2.bf16.msra.mxu0 0
  %2068 = vmatprep.mubr.bf16.mxu0 0
  %2069 = vmatmul.mubr.bf16.gmra.mxu0 %v2009
  %v2070 = vpop.f32.mrf.mxu0
  %v2071 = vadd.f32 0.0, %v2070
  %v2072 = vpop.f32.mrf.mxu0
  %v2073 = vpop.f32.mrf.mxu0
  %v2074 = vadd.f32 0.0, %v2073
  %v2075 = vpop.f32.mrf.mxu0
  %2076 = vmatprep.mubr.bf16.mxu0 0
  %2077 = vmatmul.mubr.bf16.gmra.mxu0 %v2012
  %v2078 = vpop.f32.mrf.mxu0
  %v2079 = vadd.f32 0.0, %v2078
  %v2080 = vpop.f32.mrf.mxu0
  %v2081 = vpop.f32.mrf.mxu0
  %v2082 = vadd.f32 0.0, %v2081
  %v2083 = vpop.f32.mrf.mxu0
  %2084 = vmatprep.mubr.bf16.mxu0 0
  %2085 = vmatmul.mubr.bf16.gmra.mxu0 %v2015
  %v2086 = vpop.f32.mrf.mxu0
  %v2087 = vadd.f32 0.0, %v2086
  %v2088 = vpop.f32.mrf.mxu0
  %v2089 = vpop.f32.mrf.mxu0
  %v2090 = vadd.f32 0.0, %v2089
  %v2091 = vpop.f32.mrf.mxu0
  %2092 = vmatprep.mubr.bf16.mxu0 0
  %2093 = vmatmul.mubr.bf16.gmra.mxu0 %v2018
  %v2094 = vpop.f32.mrf.mxu0
  %v2095 = vadd.f32 0.0, %v2094
  %v2096 = vpop.f32.mrf.mxu0
  %v2097 = vpop.f32.mrf.mxu0
  %v2098 = vadd.f32 0.0, %v2097
  %v2099 = vpop.f32.mrf.mxu0
  %2100 = vmatprep.mubr.bf16.mxu0 0
  %2101 = vmatmul.mubr.bf16.gmra.mxu0 %v2021
  %v2102 = vpop.f32.mrf.mxu0
  %v2103 = vadd.f32 0.0, %v2102
  %v2104 = vpop.f32.mrf.mxu0
  %v2105 = vpop.f32.mrf.mxu0
  %v2106 = vadd.f32 0.0, %v2105
  %v2107 = vpop.f32.mrf.mxu0
  %2108 = vmatprep.mubr.bf16.mxu0 0
  %2109 = vmatmul.mubr.bf16.gmra.mxu0 %v2024
  %v2110 = vpop.f32.mrf.mxu0
  %v2111 = vadd.f32 0.0, %v2110
  %v2112 = vpop.f32.mrf.mxu0
  %v2113 = vpop.f32.mrf.mxu0
  %v2114 = vadd.f32 0.0, %v2113
  %v2115 = vpop.f32.mrf.mxu0
  %2116 = vmatprep.mubr.bf16.mxu0 0
  %2117 = vmatmul.mubr.bf16.gmra.mxu0 %v2027
  %v2118 = vpop.f32.mrf.mxu0
  %v2119 = vadd.f32 0.0, %v2118
  %v2120 = vpop.f32.mrf.mxu0
  %v2121 = vpop.f32.mrf.mxu0
  %v2122 = vadd.f32 0.0, %v2121
  %v2123 = vpop.f32.mrf.mxu0
  %2124 = vmatprep.mubr.bf16.mxu0 0
  %2125 = vmatmul.mubr.bf16.gmra.mxu0 %v2030
  %v2126 = vpop.f32.mrf.mxu0
  %v2127 = vadd.f32 0.0, %v2126
  %v2128 = vpop.f32.mrf.mxu0
  %v2129 = vpop.f32.mrf.mxu0
  %v2130 = vadd.f32 0.0, %v2129
  %v2131 = vpop.f32.mrf.mxu0
  %2132 = vdwg.mxu0
  %v2133 = vsel %vm744, %v2071, 0.0
  %v2134 = vsel %vm744, %v2074, 0.0
  %v2135 = vadd.f32 %v2133, %v2134
  %v2136 = vsel %vm744, %v2079, 0.0
  %v2137 = vadd.f32 %v2135, %v2136
  %v2138 = vsel %vm744, %v2082, 0.0
  %v2139 = vadd.f32 %v2137, %v2138
  %v2140 = vsel %vm744, %v2087, 0.0
  %v2141 = vadd.f32 %v2139, %v2140
  %v2142 = vsel %vm744, %v2090, 0.0
  %v2143 = vadd.f32 %v2141, %v2142
  %v2144 = vsel %vm744, %v2095, 0.0
  %v2145 = vadd.f32 %v2143, %v2144
  %v2146 = vsel %vm744, %v2098, 0.0
  %v2147 = vadd.f32 %v2145, %v2146
  %v2148 = vsel %vm744, %v2103, 0.0
  %v2149 = vadd.f32 %v2147, %v2148
  %v2150 = vsel %vm744, %v2106, 0.0
  %v2151 = vadd.f32 %v2149, %v2150
  %v2152 = vsel %vm744, %v2111, 0.0
  %v2153 = vadd.f32 %v2151, %v2152
  %v2154 = vsel %vm744, %v2114, 0.0
  %v2155 = vadd.f32 %v2153, %v2154
  %v2156 = vsel %vm744, %v2119, 0.0
  %v2157 = vadd.f32 %v2155, %v2156
  %v2158 = vsel %vm744, %v2122, 0.0
  %v2159 = vadd.f32 %v2157, %v2158
  %v2160 = vsel %vm744, %v2127, 0.0
  %v2161 = vadd.f32 %v2159, %v2160
  %v2162 = vsel %vm744, %v2130, 0.0
  %v2163 = vadd.f32 %v2161, %v2162
  %v2164 = vrot.slane %v2163, 4
  %v2165 = vadd.f32 %v2163, %v2164
  %v2166 = vrot.slane %v2165, 2
  %v2167 = vadd.f32 %v2165, %v2166
  %v2168 = vrot.slane %v2167, 1
  %v2169 = vadd.f32 %v2167, %v2168
  %v2170 = vmul.f32 %v2169, 0.0078125
  %v2171 = vmul.f32 %v2071, %v2071
  %v2172 = vmul.f32 %v2074, %v2074
  %v2173 = vmul.f32 %v2079, %v2079
  %v2174 = vmul.f32 %v2082, %v2082
  %v2175 = vmul.f32 %v2087, %v2087
  %v2176 = vmul.f32 %v2090, %v2090
  %v2177 = vmul.f32 %v2095, %v2095
  %v2178 = vmul.f32 %v2098, %v2098
  %v2179 = vmul.f32 %v2103, %v2103
  %v2180 = vmul.f32 %v2106, %v2106
  %v2181 = vmul.f32 %v2111, %v2111
  %v2182 = vmul.f32 %v2114, %v2114
  %v2183 = vmul.f32 %v2119, %v2119
  %v2184 = vmul.f32 %v2122, %v2122
  %v2185 = vmul.f32 %v2127, %v2127
  %v2186 = vmul.f32 %v2130, %v2130
  %v2187 = vsel %vm744, %v2171, 0.0
  %v2188 = vsel %vm744, %v2172, 0.0
  %v2189 = vadd.f32 %v2187, %v2188
  %v2190 = vsel %vm744, %v2173, 0.0
  %v2191 = vadd.f32 %v2189, %v2190
  %v2192 = vsel %vm744, %v2174, 0.0
  %v2193 = vadd.f32 %v2191, %v2192
  %v2194 = vsel %vm744, %v2175, 0.0
  %v2195 = vadd.f32 %v2193, %v2194
  %v2196 = vsel %vm744, %v2176, 0.0
  %v2197 = vadd.f32 %v2195, %v2196
  %v2198 = vsel %vm744, %v2177, 0.0
  %v2199 = vadd.f32 %v2197, %v2198
  %v2200 = vsel %vm744, %v2178, 0.0
  %v2201 = vadd.f32 %v2199, %v2200
  %v2202 = vsel %vm744, %v2179, 0.0
  %v2203 = vadd.f32 %v2201, %v2202
  %v2204 = vsel %vm744, %v2180, 0.0
  %v2205 = vadd.f32 %v2203, %v2204
  %v2206 = vsel %vm744, %v2181, 0.0
  %v2207 = vadd.f32 %v2205, %v2206
  %v2208 = vsel %vm744, %v2182, 0.0
  %v2209 = vadd.f32 %v2207, %v2208
  %v2210 = vsel %vm744, %v2183, 0.0
  %v2211 = vadd.f32 %v2209, %v2210
  %v2212 = vsel %vm744, %v2184, 0.0
  %v2213 = vadd.f32 %v2211, %v2212
  %v2214 = vsel %vm744, %v2185, 0.0
  %v2215 = vadd.f32 %v2213, %v2214
  %v2216 = vsel %vm744, %v2186, 0.0
  %v2217 = vadd.f32 %v2215, %v2216
  %v2218 = vrot.slane %v2217, 4
  %v2219 = vadd.f32 %v2217, %v2218
  %v2220 = vrot.slane %v2219, 2
  %v2221 = vadd.f32 %v2219, %v2220
  %v2222 = vrot.slane %v2221, 1
  %v2223 = vadd.f32 %v2221, %v2222
  %v2224 = vmul.f32 %v2223, 0.0078125
  %v2225 = vmul.f32 %v2170, %v2170
  %v2226 = vsub.f32 %v2224, %v2225
  %v2227 = vld [vmem:[%s8] sm:$0x1]
  %v2228 = vadd.f32 %v2226, 1e-05
  %v2229 = vrsqrt.pop %v2228
  %v2230 = vmul.f32 %v2227, %v2229
  %v2231 = vld [vmem:[%s9] sm:$0x1]
  %v2232 = vmul.f32 %v2170, %v2230
  %v2233 = vsub.f32 %v2231, %v2232
  %v2235 = vlaneseq
  %v2236 = vshrl.u32 %v2235, 7
  %v2237 = vsub.s32 0, %v2236
  %v2238 = vrot.slane %v2230, %v2237
  %v2240 = vmul.f32 %v2071, %v2238
  %v2241 = vmul.f32 %v2074, %v2238
  %v2242 = vmul.f32 %v2079, %v2238
  %v2243 = vmul.f32 %v2082, %v2238
  %v2244 = vmul.f32 %v2087, %v2238
  %v2245 = vmul.f32 %v2090, %v2238
  %v2246 = vmul.f32 %v2095, %v2238
  %v2247 = vmul.f32 %v2098, %v2238
  %v2248 = vmul.f32 %v2103, %v2238
  %v2249 = vmul.f32 %v2106, %v2238
  %v2250 = vmul.f32 %v2111, %v2238
  %v2251 = vmul.f32 %v2114, %v2238
  %v2252 = vmul.f32 %v2119, %v2238
  %v2253 = vmul.f32 %v2122, %v2238
  %v2254 = vmul.f32 %v2127, %v2238
  %v2255 = vmul.f32 %v2130, %v2238
  %v2257 = vlaneseq
  %v2258 = vshrl.u32 %v2257, 7
  %v2259 = vsub.s32 0, %v2258
  %v2260 = vrot.slane %v2233, %v2259
  %v2262 = vadd.f32 %v2240, %v2260
  %v2263 = vadd.f32 %v2241, %v2260
  %v2264 = vadd.f32 %v2242, %v2260
  %v2265 = vadd.f32 %v2243, %v2260
  %v2266 = vadd.f32 %v2244, %v2260
  %v2267 = vadd.f32 %v2245, %v2260
  %v2268 = vadd.f32 %v2246, %v2260
  %v2269 = vadd.f32 %v2247, %v2260
  %v2270 = vadd.f32 %v2248, %v2260
  %v2271 = vadd.f32 %v2249, %v2260
  %v2272 = vadd.f32 %v2250, %v2260
  %v2273 = vadd.f32 %v2251, %v2260
  %v2274 = vadd.f32 %v2252, %v2260
  %v2275 = vadd.f32 %v2253, %v2260
  %v2276 = vadd.f32 %v2254, %v2260
  %v2277 = vadd.f32 %v2255, %v2260
  %2294 = vrot.lane.b32.xlu0 %v1146, 120
  %v2295 = vpop.permute.xlu0 %2294
  %2296 = vrot.lane.b32.xlu0 %v1147, 120
  %v2297 = vpop.permute.xlu0 %2296
  %2298 = vrot.lane.b32.xlu0 %v1148, 120
  %v2299 = vpop.permute.xlu0 %2298
  %2300 = vrot.lane.b32.xlu0 %v1149, 120
  %v2301 = vpop.permute.xlu0 %2300
  %2302 = vrot.lane.b32.xlu0 %v1150, 120
  %v2303 = vpop.permute.xlu0 %2302
  %2304 = vrot.lane.b32.xlu0 %v1151, 120
  %v2305 = vpop.permute.xlu0 %2304
  %2306 = vrot.lane.b32.xlu0 %v1152, 120
  %v2307 = vpop.permute.xlu0 %2306
  %2308 = vrot.lane.b32.xlu0 %v1153, 120
  %v2309 = vpop.permute.xlu0 %2308
  %2310 = vrot.lane.b32.xlu0 %v1154, 120
  %v2311 = vpop.permute.xlu0 %2310
  %2312 = vrot.lane.b32.xlu0 %v1155, 120
  %v2313 = vpop.permute.xlu0 %2312
  %2314 = vrot.lane.b32.xlu0 %v1156, 120
  %v2315 = vpop.permute.xlu0 %2314
  %2316 = vrot.lane.b32.xlu0 %v1157, 120
  %v2317 = vpop.permute.xlu0 %2316
  %2318 = vrot.lane.b32.xlu0 %v1158, 120
  %v2319 = vpop.permute.xlu0 %2318
  %2320 = vrot.lane.b32.xlu0 %v1159, 120
  %v2321 = vpop.permute.xlu0 %2320
  %2322 = vrot.lane.b32.xlu0 %v1160, 120
  %v2323 = vpop.permute.xlu0 %2322
  %2324 = vrot.lane.b32.xlu0 %v1161, 120
  %v2325 = vpop.permute.xlu0 %2324
  %v2342 = vadd.f32 %v2262, %v2295
  %v2343 = vadd.f32 %v2263, %v2297
  %v2344 = vadd.f32 %v2264, %v2299
  %v2345 = vadd.f32 %v2265, %v2301
  %v2346 = vadd.f32 %v2266, %v2303
  %v2347 = vadd.f32 %v2267, %v2305
  %v2348 = vadd.f32 %v2268, %v2307
  %v2349 = vadd.f32 %v2269, %v2309
  %v2350 = vadd.f32 %v2270, %v2311
  %v2351 = vadd.f32 %v2271, %v2313
  %v2352 = vadd.f32 %v2272, %v2315
  %v2353 = vadd.f32 %v2273, %v2317
  %v2354 = vadd.f32 %v2274, %v2319
  %v2355 = vadd.f32 %v2275, %v2321
  %v2356 = vadd.f32 %v2276, %v2323
  %v2357 = vadd.f32 %v2277, %v2325
  %v2358 = vmax.f32 %v2342, 0.0
  %v2359 = vmax.f32 %v2343, 0.0
  %v2360 = vmax.f32 %v2344, 0.0
  %v2361 = vmax.f32 %v2345, 0.0
  %v2362 = vmax.f32 %v2346, 0.0
  %v2363 = vmax.f32 %v2347, 0.0
  %v2364 = vmax.f32 %v2348, 0.0
  %v2365 = vmax.f32 %v2349, 0.0
  %v2366 = vmax.f32 %v2350, 0.0
  %v2367 = vmax.f32 %v2351, 0.0
  %v2368 = vmax.f32 %v2352, 0.0
  %v2369 = vmax.f32 %v2353, 0.0
  %v2370 = vmax.f32 %v2354, 0.0
  %v2371 = vmax.f32 %v2355, 0.0
  %v2372 = vmax.f32 %v2356, 0.0
  %v2373 = vmax.f32 %v2357, 0.0
  %2374 = vst.msk [vmem:[%s10] sm:$0xff] %vm744, %v2358
  %2375 = vst.msk [vmem:[%s10 + $0x8] sm:$0xff] %vm744, %v2359
  %2376 = vst.msk [vmem:[%s10 + $0x10] sm:$0xff] %vm744, %v2360
  %2377 = vst.msk [vmem:[%s10 + $0x18] sm:$0xff] %vm744, %v2361
  %2378 = vst.msk [vmem:[%s10 + $0x20] sm:$0xff] %vm744, %v2362
  %2379 = vst.msk [vmem:[%s10 + $0x28] sm:$0xff] %vm744, %v2363
  %2380 = vst.msk [vmem:[%s10 + $0x30] sm:$0xff] %vm744, %v2364
  %2381 = vst.msk [vmem:[%s10 + $0x38] sm:$0xff] %vm744, %v2365
  %2382 = vst.msk [vmem:[%s10 + $0x40] sm:$0xff] %vm744, %v2366
  %2383 = vst.msk [vmem:[%s10 + $0x48] sm:$0xff] %vm744, %v2367
  %2384 = vst.msk [vmem:[%s10 + $0x50] sm:$0xff] %vm744, %v2368
  %2385 = vst.msk [vmem:[%s10 + $0x58] sm:$0xff] %vm744, %v2369
  %2386 = vst.msk [vmem:[%s10 + $0x60] sm:$0xff] %vm744, %v2370
  %2387 = vst.msk [vmem:[%s10 + $0x68] sm:$0xff] %vm744, %v2371
  %2388 = vst.msk [vmem:[%s10 + $0x70] sm:$0xff] %vm744, %v2372
  %2389 = vst.msk [vmem:[%s10 + $0x78] sm:$0xff] %vm744, %v2373
  // Predicated region
  $region42: #{tpu_custom_call.1} parent=0 // pred_check
    _
  $region43: #{tpu_custom_call.1} parent=0 // pred_check_branch
    %2391 = sbr.rel (0) target = $region45
  $region44: #{tpu_custom_call.1} parent=0 // pred_region
    _
  $region45: #{tpu_custom_call.1} parent=0 // pred_fallthru
    _
  // Predicated region
  $region46: #{tpu_custom_call.1} parent=0 // pred_check
    _
  $region47: #{tpu_custom_call.1} parent=0 // pred_check_branch
    %2393 = sbr.rel (0) target = $region49
  $region48: #{tpu_custom_call.1} parent=0 // pred_region
    _
  $region49: #{tpu_custom_call.1} parent=0 // pred_fallthru
    _

</llo_original>
